<compile_context>
chip_gen: v7x
topology: tpu7x:2x2x1
jax: 0.10.0
libtpu: 0.0.40
codegen_flags: <defaults>
</compile_context>

<pallas_src>
from functools import lru_cache

import numpy as np
import jax
import jax.numpy as jnp
from jax.experimental import pallas as pl
from jax.experimental.pallas import tpu as pltpu  # noqa: F401  (TPU backend)

# ---- small hyperparameters consistent with the module's forward -----------
B = 2            # batch
N_IN = 8         # input token count (already-embedded "glove" tokens)
DIM = 32         # low_dim
DEPTH = 2
HEADS = 4
DIM_HEAD = 8
INNER = HEADS * DIM_HEAD          # = 32
MLP_DIM = 64
NUM_GUSSAN = 3
SEQ = NUM_GUSSAN + 1 + N_IN       # cls tokens + sample token + input tokens
HEAD_OUT = 128                    # fused head output lanes (2*DIM | G | pad)
LN_EPS = 1e-5


def _layernorm(x, g, b):
    mu = jnp.mean(x, axis=-1, keepdims=True)
    xc = x - mu
    var = jnp.mean(xc * xc, axis=-1, keepdims=True)
    return xc * jax.lax.rsqrt(var + LN_EPS) * g + b


# ----------------------- fully fused forward kernel ------------------------
def fused_forward_kernel(x_ref, wqkv_ref, wo_ref, w1_ref, w2_ref, vecs_ref,
                         wh_ref, bh_ref, hsel_ref, bias_ref, out_ref):
    f32 = jnp.float32
    x = x_ref[...].astype(f32)          # (B*S, D) — whole batch in one block
    hsel = hsel_ref[...]                # (H*B*S, INNER) head-block selector
    bias = bias_ref[...]                # (B*S, H*B*S) additive cross-batch mask

    for l in range(DEPTH):              # unrolled (DEPTH = 2)
        vl = vecs_ref[l]                # (8, MLP_DIM) packed per-layer vectors

        # ---------- multi-head self-attention (pre-norm) ----------
        xn = _layernorm(x, vl[0:1, 0:DIM], vl[1:2, 0:DIM])
        # fused lane-dense QKV projection: one (B*S, D) @ (D, 3*INNER) matmul
        qkv = jnp.dot(xn, wqkv_ref[l], preferred_element_type=f32)   # (24, 96)
        q = qkv[:, 0:INNER]
        k = qkv[:, INNER:2 * INNER]
        v = qkv[:, 2 * INNER:3 * INNER]

        # Replicate K/V once per head along sublanes, mask to the head's
        # 8 lanes; scores / P@V / softmax denominators for all (batch, head)
        # pairs then become three lane-dense 2-D matmuls.
        k_rep = jnp.concatenate([k] * HEADS, axis=0) * hsel          # (96, 32)
        v_rep = jnp.concatenate([v] * HEADS, axis=0) * hsel          # (96, 32)

        s = jax.lax.dot_general(q, k_rep, (((1,), (1,)), ((), ())),
                                preferred_element_type=f32)          # (24, 96)
        s = s + bias                                   # -1e30 on cross-batch
        s = s - jnp.max(s, axis=-1, keepdims=True)     # per-row max: exact
        p = jnp.exp(s)                                 # unnormalized probs
        pv = jnp.dot(p, v_rep, preferred_element_type=f32)           # (24, 32)
        den = jnp.dot(p, hsel, preferred_element_type=f32)           # per-head sums
        o = pv * pl.reciprocal(den, approx=True)       # (S, H*dh) concat layout

        # fused output projection over the concatenated-heads axis + residual
        x = x + jnp.dot(o, wo_ref[l], preferred_element_type=f32) + vl[4:5, 0:DIM]

        # ---------------- feed-forward (pre-norm, GELU) ----------------
        xn2 = _layernorm(x, vl[2:3, 0:DIM], vl[3:4, 0:DIM])
        h1 = jnp.dot(xn2, w1_ref[l], preferred_element_type=f32) + vl[5:6, 0:MLP_DIM]
        h1 = jax.nn.gelu(h1)
        x = x + jnp.dot(h1, w2_ref[l], preferred_element_type=f32) + vl[6:7, 0:DIM]

    # ----- fused head: [to_mu_logvar | to_prob | zero-pad] -> 128 lanes -----
    out = jnp.dot(x, wh_ref[...], preferred_element_type=f32) + bh_ref[...]
    out_ref[...] = out.astype(out_ref.dtype)


@lru_cache(maxsize=None)
def _build_masks(batch):
    """Structural constants built host-side (no in-kernel integer division)."""
    bs = batch * SEQ
    hb = HEADS * bs
    # head-block selector: hsel[c, lane] = 1 iff head(c) == head(lane)
    c_head = (np.arange(hb) // bs)[:, None]
    l_head = (np.arange(INNER) // DIM_HEAD)[None, :]
    hsel = (c_head == l_head).astype(np.float32)
    # additive batch mask on scores: 0 for same-batch (query, key), else -1e30
    q_bat = (np.arange(bs) // SEQ)[:, None]
    k_bat = ((np.arange(hb) % bs) // SEQ)[None, :]
    bias = np.where(q_bat == k_bat, 0.0, -1e30).astype(np.float32)
    return jnp.asarray(hsel), jnp.asarray(bias)


def fused_forward(x_flat, params):
    rows, _ = x_flat.shape
    hsel, attn_bias = _build_masks(rows // SEQ)
    inputs = (x_flat, params["wqkv"], params["wo"], params["w1"], params["w2"],
              params["vecs"], params["w_head"], params["b_head"], hsel, attn_bias)
    in_specs = [pl.BlockSpec(a.shape, lambda i, nd=a.ndim: (0,) * nd)
                for a in inputs]
    return pl.pallas_call(
        fused_forward_kernel,
        out_shape=jax.ShapeDtypeStruct((rows, HEAD_OUT), jnp.float32),
        grid=(1,),
        in_specs=in_specs,
        out_specs=pl.BlockSpec((rows, HEAD_OUT), lambda i: (0, 0)),
    )(*inputs)


# ------------------------------- parameters --------------------------------
def init_params(key):
    def nrm(k, shape, scale=0.02):
        return scale * jax.random.normal(k, shape, dtype=jnp.float32)

    keys = iter(jax.random.split(key, 10))
    scale_q = DIM_HEAD ** -0.5

    # 1/sqrt(dim_head) folded into Wq here (not per-forward, not per-score).
    wq = nrm(next(keys), (DEPTH, DIM, INNER)) * scale_q
    wk = nrm(next(keys), (DEPTH, DIM, INNER))
    wv = nrm(next(keys), (DEPTH, DIM, INNER))
    wqkv = jnp.concatenate([wq, wk, wv], axis=-1)          # (DEPTH, DIM, 96)

    # Packed per-layer vectors: rows 0..6 = ln1_g, ln1_b, ln2_g, ln2_b,
    # attn-out bias, ffn-hidden bias (64 lanes), ffn-out bias; row 7 = pad.
    vecs = jnp.zeros((DEPTH, 8, MLP_DIM), jnp.float32)
    vecs = vecs.at[:, 0, :DIM].set(1.0)                    # ln1 gamma
    vecs = vecs.at[:, 2, :DIM].set(1.0)                    # ln2 gamma

    # Fused head weight: lanes 0:64 = to_mu_logvar, 64:67 = to_prob, rest pad.
    w_ml = nrm(next(keys), (DIM, 2 * DIM))
    w_p = nrm(next(keys), (DIM, NUM_GUSSAN))
    w_head = jnp.zeros((DIM, HEAD_OUT), jnp.float32)
    w_head = w_head.at[:, :2 * DIM].set(w_ml)
    w_head = w_head.at[:, 2 * DIM:2 * DIM + NUM_GUSSAN].set(w_p)

    return dict(
        init_mu=jax.random.normal(next(keys), (1, 1, DIM), dtype=jnp.float32),
        cls_tokens=nrm(next(keys), (1, NUM_GUSSAN, DIM), scale=1.0),
        wqkv=wqkv,
        wo=nrm(next(keys), (DEPTH, INNER, DIM)),           # concatenated-heads layout
        w1=nrm(next(keys), (DEPTH, DIM, MLP_DIM)),
        w2=nrm(next(keys), (DEPTH, MLP_DIM, DIM)),
        vecs=vecs,
        w_head=w_head,
        b_head=jnp.zeros((1, HEAD_OUT), jnp.float32),
    )


# -------------------------------- forward ----------------------------------
def glove_mixed_gussan_forward(params, x, key):
    b, n, d = x.shape
    k_sample, k_gumbel = jax.random.split(key)

    # sample token: randn(b,1,d) + init_mu; prepend num_gussan cls tokens
    sample = jax.random.normal(k_sample, (b, 1, d), dtype=x.dtype) + params["init_mu"]
    cls = jnp.broadcast_to(params["cls_tokens"], (b, NUM_GUSSAN, d))
    seq = jnp.concatenate([cls, sample, x], axis=1)               # (b, SEQ, d)

    # single fused Pallas kernel: encoder (DEPTH layers) + take_cls + head
    head_out = fused_forward(seq.reshape(b * SEQ, d), params)     # (b*SEQ, 128)
    head_out = head_out.reshape(b, SEQ, HEAD_OUT)
    mu_logvar = head_out[:, :NUM_GUSSAN, :2 * d]                  # (b, G, 2d)
    prob_logits = head_out[:, NUM_GUSSAN:NUM_GUSSAN + 1,
                           2 * d:2 * d + NUM_GUSSAN]              # (b, 1, G)

    # F.gumbel_softmax(hard=True), tau=1, with straight-through estimator
    u = jax.random.uniform(k_gumbel, prob_logits.shape,
                           minval=1e-6, maxval=1.0 - 1e-6)
    gumbel = -jnp.log(-jnp.log(u))
    y_soft = jax.nn.softmax(prob_logits + gumbel, axis=-1)
    y_hard = jax.nn.one_hot(jnp.argmax(y_soft, axis=-1), NUM_GUSSAN,
                            dtype=y_soft.dtype)                   # (b, 1, G)
    y = y_hard + y_soft - jax.lax.stop_gradient(y_soft)           # value == y_hard
    prob = jnp.transpose(y, (0, 2, 1))                            # (b, G, 1)

    out = jnp.sum(mu_logvar * prob, axis=1)                       # (b, 2d)
    return out.reshape(b, 2, d)


if __name__ == "__main__":
    params = init_params(jax.random.PRNGKey(1))
    k_x, k_fwd = jax.random.split(jax.random.PRNGKey(0))
    x = jax.random.normal(k_x, (B, N_IN, DIM), dtype=jnp.float32)

    fwd = jax.jit(glove_mixed_gussan_forward)
    out = fwd(params, x, k_fwd)
    jax.block_until_ready(out)
    assert out.shape == (B, 2, DIM), out.shape
    assert bool(jnp.all(jnp.isfinite(out)))
    print("KERNEL_OK")
</pallas_src>

<mosaic_0001>
module attributes {stable_mosaic.version = 11 : i64} {
  func.func @fused_forward_kernel(%arg0: i32, %arg1: memref<24x32xf32, #tpu.memory_space<vmem>>, %arg2: memref<2x32x96xf32, #tpu.memory_space<vmem>>, %arg3: memref<2x32x32xf32, #tpu.memory_space<vmem>>, %arg4: memref<2x32x64xf32, #tpu.memory_space<vmem>>, %arg5: memref<2x64x32xf32, #tpu.memory_space<vmem>>, %arg6: memref<2x8x64xf32, #tpu.memory_space<vmem>>, %arg7: memref<32x128xf32, #tpu.memory_space<vmem>>, %arg8: memref<1x128xf32, #tpu.memory_space<vmem>>, %arg9: memref<96x32xf32, #tpu.memory_space<vmem>>, %arg10: memref<24x96xf32, #tpu.memory_space<vmem>>, %arg11: memref<24x128xf32, #tpu.memory_space<vmem>>) attributes {dimension_semantics = [#tpu.dimension_semantics<arbitrary>], iteration_bounds = array<i64: 1>, scalar_prefetch = 0 : i64, scratch_operands = 0 : i64, tpu.core_type = #tpu.core_type<tc>, window_params = [{pipeline_mode = #tpu.pipeline_mode<synchronous>, transform_indices = @transform_0, window_bounds = array<i64: 24, 32>}, {pipeline_mode = #tpu.pipeline_mode<synchronous>, transform_indices = @transform_1, window_bounds = array<i64: 2, 32, 96>}, {pipeline_mode = #tpu.pipeline_mode<synchronous>, transform_indices = @transform_2, window_bounds = array<i64: 2, 32, 32>}, {pipeline_mode = #tpu.pipeline_mode<synchronous>, transform_indices = @transform_3, window_bounds = array<i64: 2, 32, 64>}, {pipeline_mode = #tpu.pipeline_mode<synchronous>, transform_indices = @transform_4, window_bounds = array<i64: 2, 64, 32>}, {pipeline_mode = #tpu.pipeline_mode<synchronous>, transform_indices = @transform_5, window_bounds = array<i64: 2, 8, 64>}, {pipeline_mode = #tpu.pipeline_mode<synchronous>, transform_indices = @transform_6, window_bounds = array<i64: 32, 128>}, {pipeline_mode = #tpu.pipeline_mode<synchronous>, transform_indices = @transform_7, window_bounds = array<i64: 1, 128>}, {pipeline_mode = #tpu.pipeline_mode<synchronous>, transform_indices = @transform_8, window_bounds = array<i64: 96, 32>}, {pipeline_mode = #tpu.pipeline_mode<synchronous>, transform_indices = @transform_9, window_bounds = array<i64: 24, 96>}, {pipeline_mode = #tpu.pipeline_mode<synchronous>, transform_indices = @transform_10, window_bounds = array<i64: 24, 128>}]} {
    %c0 = arith.constant 0 : index
    %c0_0 = arith.constant 0 : index
    %0 = vector.load %arg1[%c0, %c0_0] : memref<24x32xf32, #tpu.memory_space<vmem>>, vector<24x32xf32>
    %c0_1 = arith.constant 0 : index
    %c0_2 = arith.constant 0 : index
    %1 = vector.load %arg9[%c0_1, %c0_2] : memref<96x32xf32, #tpu.memory_space<vmem>>, vector<96x32xf32>
    %c0_3 = arith.constant 0 : index
    %c0_4 = arith.constant 0 : index
    %2 = vector.load %arg10[%c0_3, %c0_4] : memref<24x96xf32, #tpu.memory_space<vmem>>, vector<24x96xf32>
    %c0_5 = arith.constant 0 : index
    %c0_6 = arith.constant 0 : index
    %c0_7 = arith.constant 0 : index
    %3 = vector.load %arg6[%c0_5, %c0_6, %c0_7] : memref<2x8x64xf32, #tpu.memory_space<vmem>>, vector<1x8x64xf32>
    %4 = vector.shape_cast %3 : vector<1x8x64xf32> to vector<8x64xf32>
    %5 = vector.extract_strided_slice %4 {offsets = [0, 0], sizes = [1, 32], strides = [1, 1]} : vector<8x64xf32> to vector<1x32xf32>
    %6 = vector.extract_strided_slice %4 {offsets = [1, 0], sizes = [1, 32], strides = [1, 1]} : vector<8x64xf32> to vector<1x32xf32>
    %cst = arith.constant dense<0.000000e+00> : vector<24xf32>
    %7 = vector.multi_reduction <add>, %0, %cst [1] : vector<24x32xf32> to vector<24xf32>
    %8 = vector.shape_cast %7 : vector<24xf32> to vector<24x1xf32>
    %cst_8 = arith.constant 3.200000e+01 : f32
    %9 = vector.broadcast %cst_8 : f32 to vector<24x1xf32>
    %10 = arith.divf %8, %9 : vector<24x1xf32>
    %11 = vector.broadcast %10 : vector<24x1xf32> to vector<24x32xf32>
    %12 = arith.subf %0, %11 : vector<24x32xf32>
    %13 = arith.mulf %12, %12 : vector<24x32xf32>
    %cst_9 = arith.constant dense<0.000000e+00> : vector<24xf32>
    %14 = vector.multi_reduction <add>, %13, %cst_9 [1] : vector<24x32xf32> to vector<24xf32>
    %15 = vector.shape_cast %14 : vector<24xf32> to vector<24x1xf32>
    %cst_10 = arith.constant 3.200000e+01 : f32
    %16 = vector.broadcast %cst_10 : f32 to vector<24x1xf32>
    %17 = arith.divf %15, %16 : vector<24x1xf32>
    %cst_11 = arith.constant 9.99999974E-6 : f32
    %18 = vector.broadcast %cst_11 : f32 to vector<24x1xf32>
    %19 = arith.addf %17, %18 : vector<24x1xf32>
    %20 = math.rsqrt %19 : vector<24x1xf32>
    %21 = vector.broadcast %20 : vector<24x1xf32> to vector<24x32xf32>
    %22 = arith.mulf %12, %21 : vector<24x32xf32>
    %23 = vector.broadcast %5 : vector<1x32xf32> to vector<24x32xf32>
    %24 = arith.mulf %22, %23 : vector<24x32xf32>
    %25 = vector.broadcast %6 : vector<1x32xf32> to vector<24x32xf32>
    %26 = arith.addf %24, %25 : vector<24x32xf32>
    %c0_12 = arith.constant 0 : index
    %c0_13 = arith.constant 0 : index
    %c0_14 = arith.constant 0 : index
    %27 = vector.load %arg2[%c0_12, %c0_13, %c0_14] : memref<2x32x96xf32, #tpu.memory_space<vmem>>, vector<1x32x96xf32>
    %28 = vector.shape_cast %27 : vector<1x32x96xf32> to vector<32x96xf32>
    %cst_15 = arith.constant dense<0.000000e+00> : vector<24x96xf32>
    %29 = tpu.matmul %26, %28, %cst_15 {dimension_numbers = #tpu.dot_dimension_numbers<[1], [0], [0], [1], [0, 0, 1, 1], [], []>} : vector<24x32xf32>, vector<32x96xf32>, vector<24x96xf32> -> vector<24x96xf32>
    %30 = vector.extract_strided_slice %29 {offsets = [0, 0], sizes = [24, 32], strides = [1, 1]} : vector<24x96xf32> to vector<24x32xf32>
    %31 = vector.extract_strided_slice %29 {offsets = [0, 32], sizes = [24, 32], strides = [1, 1]} : vector<24x96xf32> to vector<24x32xf32>
    %32 = vector.extract_strided_slice %29 {offsets = [0, 64], sizes = [24, 32], strides = [1, 1]} : vector<24x96xf32> to vector<24x32xf32>
    %33 = tpu.concatenate %31, %31, %31, %31 in 0 : vector<24x32xf32>, vector<24x32xf32>, vector<24x32xf32>, vector<24x32xf32> -> vector<96x32xf32>
    %34 = arith.mulf %33, %1 : vector<96x32xf32>
    %35 = tpu.concatenate %32, %32, %32, %32 in 0 : vector<24x32xf32>, vector<24x32xf32>, vector<24x32xf32>, vector<24x32xf32> -> vector<96x32xf32>
    %36 = arith.mulf %35, %1 : vector<96x32xf32>
    %cst_16 = arith.constant dense<0.000000e+00> : vector<24x96xf32>
    %37 = tpu.matmul %30, %34, %cst_16 {dimension_numbers = #tpu.dot_dimension_numbers<[1], [1], [0], [0], [0, 0, 1, 0], [], []>} : vector<24x32xf32>, vector<96x32xf32>, vector<24x96xf32> -> vector<24x96xf32>
    %38 = arith.addf %37, %2 : vector<24x96xf32>
    %cst_17 = arith.constant dense<0xFF800000> : vector<24xf32>
    %39 = vector.multi_reduction <maximumf>, %38, %cst_17 [1] : vector<24x96xf32> to vector<24xf32>
    %40 = vector.shape_cast %39 : vector<24xf32> to vector<24x1xf32>
    %41 = vector.broadcast %40 : vector<24x1xf32> to vector<24x96xf32>
    %42 = arith.subf %38, %41 : vector<24x96xf32>
    %43 = math.exp %42 : vector<24x96xf32>
    %cst_18 = arith.constant dense<0.000000e+00> : vector<24x32xf32>
    %44 = tpu.matmul %43, %36, %cst_18 {dimension_numbers = #tpu.dot_dimension_numbers<[1], [0], [0], [1], [0, 0, 1, 1], [], []>} : vector<24x96xf32>, vector<96x32xf32>, vector<24x32xf32> -> vector<24x32xf32>
    %cst_19 = arith.constant dense<0.000000e+00> : vector<24x32xf32>
    %45 = tpu.matmul %43, %1, %cst_19 {dimension_numbers = #tpu.dot_dimension_numbers<[1], [0], [0], [1], [0, 0, 1, 1], [], []>} : vector<24x96xf32>, vector<96x32xf32>, vector<24x32xf32> -> vector<24x32xf32>
    %46 = tpu.reciprocal %45 {approx = true} : vector<24x32xf32> -> vector<24x32xf32>
    %47 = arith.mulf %44, %46 : vector<24x32xf32>
    %c0_20 = arith.constant 0 : index
    %c0_21 = arith.constant 0 : index
    %c0_22 = arith.constant 0 : index
    %48 = vector.load %arg3[%c0_20, %c0_21, %c0_22] : memref<2x32x32xf32, #tpu.memory_space<vmem>>, vector<1x32x32xf32>
    %49 = vector.shape_cast %48 : vector<1x32x32xf32> to vector<32x32xf32>
    %cst_23 = arith.constant dense<0.000000e+00> : vector<24x32xf32>
    %50 = tpu.matmul %47, %49, %cst_23 {dimension_numbers = #tpu.dot_dimension_numbers<[1], [0], [0], [1], [0, 0, 1, 1], [], []>} : vector<24x32xf32>, vector<32x32xf32>, vector<24x32xf32> -> vector<24x32xf32>
    %51 = arith.addf %0, %50 : vector<24x32xf32>
    %52 = vector.extract_strided_slice %4 {offsets = [4, 0], sizes = [1, 32], strides = [1, 1]} : vector<8x64xf32> to vector<1x32xf32>
    %53 = vector.broadcast %52 : vector<1x32xf32> to vector<24x32xf32>
    %54 = arith.addf %51, %53 : vector<24x32xf32>
    %55 = vector.extract_strided_slice %4 {offsets = [2, 0], sizes = [1, 32], strides = [1, 1]} : vector<8x64xf32> to vector<1x32xf32>
    %56 = vector.extract_strided_slice %4 {offsets = [3, 0], sizes = [1, 32], strides = [1, 1]} : vector<8x64xf32> to vector<1x32xf32>
    %cst_24 = arith.constant dense<0.000000e+00> : vector<24xf32>
    %57 = vector.multi_reduction <add>, %54, %cst_24 [1] : vector<24x32xf32> to vector<24xf32>
    %58 = vector.shape_cast %57 : vector<24xf32> to vector<24x1xf32>
    %cst_25 = arith.constant 3.200000e+01 : f32
    %59 = vector.broadcast %cst_25 : f32 to vector<24x1xf32>
    %60 = arith.divf %58, %59 : vector<24x1xf32>
    %61 = vector.broadcast %60 : vector<24x1xf32> to vector<24x32xf32>
    %62 = arith.subf %54, %61 : vector<24x32xf32>
    %63 = arith.mulf %62, %62 : vector<24x32xf32>
    %cst_26 = arith.constant dense<0.000000e+00> : vector<24xf32>
    %64 = vector.multi_reduction <add>, %63, %cst_26 [1] : vector<24x32xf32> to vector<24xf32>
    %65 = vector.shape_cast %64 : vector<24xf32> to vector<24x1xf32>
    %cst_27 = arith.constant 3.200000e+01 : f32
    %66 = vector.broadcast %cst_27 : f32 to vector<24x1xf32>
    %67 = arith.divf %65, %66 : vector<24x1xf32>
    %cst_28 = arith.constant 9.99999974E-6 : f32
    %68 = vector.broadcast %cst_28 : f32 to vector<24x1xf32>
    %69 = arith.addf %67, %68 : vector<24x1xf32>
    %70 = math.rsqrt %69 : vector<24x1xf32>
    %71 = vector.broadcast %70 : vector<24x1xf32> to vector<24x32xf32>
    %72 = arith.mulf %62, %71 : vector<24x32xf32>
    %73 = vector.broadcast %55 : vector<1x32xf32> to vector<24x32xf32>
    %74 = arith.mulf %72, %73 : vector<24x32xf32>
    %75 = vector.broadcast %56 : vector<1x32xf32> to vector<24x32xf32>
    %76 = arith.addf %74, %75 : vector<24x32xf32>
    %c0_29 = arith.constant 0 : index
    %c0_30 = arith.constant 0 : index
    %c0_31 = arith.constant 0 : index
    %77 = vector.load %arg4[%c0_29, %c0_30, %c0_31] : memref<2x32x64xf32, #tpu.memory_space<vmem>>, vector<1x32x64xf32>
    %78 = vector.shape_cast %77 : vector<1x32x64xf32> to vector<32x64xf32>
    %cst_32 = arith.constant dense<0.000000e+00> : vector<24x64xf32>
    %79 = tpu.matmul %76, %78, %cst_32 {dimension_numbers = #tpu.dot_dimension_numbers<[1], [0], [0], [1], [0, 0, 1, 1], [], []>} : vector<24x32xf32>, vector<32x64xf32>, vector<24x64xf32> -> vector<24x64xf32>
    %80 = vector.extract_strided_slice %4 {offsets = [5, 0], sizes = [1, 64], strides = [1, 1]} : vector<8x64xf32> to vector<1x64xf32>
    %81 = vector.broadcast %80 : vector<1x64xf32> to vector<24x64xf32>
    %82 = arith.addf %79, %81 : vector<24x64xf32>
    %83 = arith.mulf %82, %82 : vector<24x64xf32>
    %84 = arith.mulf %82, %83 : vector<24x64xf32>
    %cst_33 = arith.constant 4.471500e-02 : f32
    %85 = vector.broadcast %cst_33 : f32 to vector<24x64xf32>
    %86 = arith.mulf %85, %84 : vector<24x64xf32>
    %87 = arith.addf %82, %86 : vector<24x64xf32>
    %cst_34 = arith.constant 0.797884583 : f32
    %88 = vector.broadcast %cst_34 : f32 to vector<24x64xf32>
    %89 = arith.mulf %88, %87 : vector<24x64xf32>
    %90 = math.tanh %89 : vector<24x64xf32>
    %cst_35 = arith.constant 1.000000e+00 : f32
    %91 = vector.broadcast %cst_35 : f32 to vector<24x64xf32>
    %92 = arith.addf %91, %90 : vector<24x64xf32>
    %cst_36 = arith.constant 5.000000e-01 : f32
    %93 = vector.broadcast %cst_36 : f32 to vector<24x64xf32>
    %94 = arith.mulf %93, %92 : vector<24x64xf32>
    %95 = arith.mulf %82, %94 : vector<24x64xf32>
    %c0_37 = arith.constant 0 : index
    %c0_38 = arith.constant 0 : index
    %c0_39 = arith.constant 0 : index
    %96 = vector.load %arg5[%c0_37, %c0_38, %c0_39] : memref<2x64x32xf32, #tpu.memory_space<vmem>>, vector<1x64x32xf32>
    %97 = vector.shape_cast %96 : vector<1x64x32xf32> to vector<64x32xf32>
    %cst_40 = arith.constant dense<0.000000e+00> : vector<24x32xf32>
    %98 = tpu.matmul %95, %97, %cst_40 {dimension_numbers = #tpu.dot_dimension_numbers<[1], [0], [0], [1], [0, 0, 1, 1], [], []>} : vector<24x64xf32>, vector<64x32xf32>, vector<24x32xf32> -> vector<24x32xf32>
    %99 = arith.addf %54, %98 : vector<24x32xf32>
    %100 = vector.extract_strided_slice %4 {offsets = [6, 0], sizes = [1, 32], strides = [1, 1]} : vector<8x64xf32> to vector<1x32xf32>
    %101 = vector.broadcast %100 : vector<1x32xf32> to vector<24x32xf32>
    %102 = arith.addf %99, %101 : vector<24x32xf32>
    %c1 = arith.constant 1 : index
    %c0_41 = arith.constant 0 : index
    %c0_42 = arith.constant 0 : index
    %103 = vector.load %arg6[%c1, %c0_41, %c0_42] : memref<2x8x64xf32, #tpu.memory_space<vmem>>, vector<1x8x64xf32>
    %104 = vector.shape_cast %103 : vector<1x8x64xf32> to vector<8x64xf32>
    %105 = vector.extract_strided_slice %104 {offsets = [0, 0], sizes = [1, 32], strides = [1, 1]} : vector<8x64xf32> to vector<1x32xf32>
    %106 = vector.extract_strided_slice %104 {offsets = [1, 0], sizes = [1, 32], strides = [1, 1]} : vector<8x64xf32> to vector<1x32xf32>
    %cst_43 = arith.constant dense<0.000000e+00> : vector<24xf32>
    %107 = vector.multi_reduction <add>, %102, %cst_43 [1] : vector<24x32xf32> to vector<24xf32>
    %108 = vector.shape_cast %107 : vector<24xf32> to vector<24x1xf32>
    %cst_44 = arith.constant 3.200000e+01 : f32
    %109 = vector.broadcast %cst_44 : f32 to vector<24x1xf32>
    %110 = arith.divf %108, %109 : vector<24x1xf32>
    %111 = vector.broadcast %110 : vector<24x1xf32> to vector<24x32xf32>
    %112 = arith.subf %102, %111 : vector<24x32xf32>
    %113 = arith.mulf %112, %112 : vector<24x32xf32>
    %cst_45 = arith.constant dense<0.000000e+00> : vector<24xf32>
    %114 = vector.multi_reduction <add>, %113, %cst_45 [1] : vector<24x32xf32> to vector<24xf32>
    %115 = vector.shape_cast %114 : vector<24xf32> to vector<24x1xf32>
    %cst_46 = arith.constant 3.200000e+01 : f32
    %116 = vector.broadcast %cst_46 : f32 to vector<24x1xf32>
    %117 = arith.divf %115, %116 : vector<24x1xf32>
    %cst_47 = arith.constant 9.99999974E-6 : f32
    %118 = vector.broadcast %cst_47 : f32 to vector<24x1xf32>
    %119 = arith.addf %117, %118 : vector<24x1xf32>
    %120 = math.rsqrt %119 : vector<24x1xf32>
    %121 = vector.broadcast %120 : vector<24x1xf32> to vector<24x32xf32>
    %122 = arith.mulf %112, %121 : vector<24x32xf32>
    %123 = vector.broadcast %105 : vector<1x32xf32> to vector<24x32xf32>
    %124 = arith.mulf %122, %123 : vector<24x32xf32>
    %125 = vector.broadcast %106 : vector<1x32xf32> to vector<24x32xf32>
    %126 = arith.addf %124, %125 : vector<24x32xf32>
    %c1_48 = arith.constant 1 : index
    %c0_49 = arith.constant 0 : index
    %c0_50 = arith.constant 0 : index
    %127 = vector.load %arg2[%c1_48, %c0_49, %c0_50] : memref<2x32x96xf32, #tpu.memory_space<vmem>>, vector<1x32x96xf32>
    %128 = vector.shape_cast %127 : vector<1x32x96xf32> to vector<32x96xf32>
    %cst_51 = arith.constant dense<0.000000e+00> : vector<24x96xf32>
    %129 = tpu.matmul %126, %128, %cst_51 {dimension_numbers = #tpu.dot_dimension_numbers<[1], [0], [0], [1], [0, 0, 1, 1], [], []>} : vector<24x32xf32>, vector<32x96xf32>, vector<24x96xf32> -> vector<24x96xf32>
    %130 = vector.extract_strided_slice %129 {offsets = [0, 0], sizes = [24, 32], strides = [1, 1]} : vector<24x96xf32> to vector<24x32xf32>
    %131 = vector.extract_strided_slice %129 {offsets = [0, 32], sizes = [24, 32], strides = [1, 1]} : vector<24x96xf32> to vector<24x32xf32>
    %132 = vector.extract_strided_slice %129 {offsets = [0, 64], sizes = [24, 32], strides = [1, 1]} : vector<24x96xf32> to vector<24x32xf32>
    %133 = tpu.concatenate %131, %131, %131, %131 in 0 : vector<24x32xf32>, vector<24x32xf32>, vector<24x32xf32>, vector<24x32xf32> -> vector<96x32xf32>
    %134 = arith.mulf %133, %1 : vector<96x32xf32>
    %135 = tpu.concatenate %132, %132, %132, %132 in 0 : vector<24x32xf32>, vector<24x32xf32>, vector<24x32xf32>, vector<24x32xf32> -> vector<96x32xf32>
    %136 = arith.mulf %135, %1 : vector<96x32xf32>
    %cst_52 = arith.constant dense<0.000000e+00> : vector<24x96xf32>
    %137 = tpu.matmul %130, %134, %cst_52 {dimension_numbers = #tpu.dot_dimension_numbers<[1], [1], [0], [0], [0, 0, 1, 0], [], []>} : vector<24x32xf32>, vector<96x32xf32>, vector<24x96xf32> -> vector<24x96xf32>
    %138 = arith.addf %137, %2 : vector<24x96xf32>
    %cst_53 = arith.constant dense<0xFF800000> : vector<24xf32>
    %139 = vector.multi_reduction <maximumf>, %138, %cst_53 [1] : vector<24x96xf32> to vector<24xf32>
    %140 = vector.shape_cast %139 : vector<24xf32> to vector<24x1xf32>
    %141 = vector.broadcast %140 : vector<24x1xf32> to vector<24x96xf32>
    %142 = arith.subf %138, %141 : vector<24x96xf32>
    %143 = math.exp %142 : vector<24x96xf32>
    %cst_54 = arith.constant dense<0.000000e+00> : vector<24x32xf32>
    %144 = tpu.matmul %143, %136, %cst_54 {dimension_numbers = #tpu.dot_dimension_numbers<[1], [0], [0], [1], [0, 0, 1, 1], [], []>} : vector<24x96xf32>, vector<96x32xf32>, vector<24x32xf32> -> vector<24x32xf32>
    %cst_55 = arith.constant dense<0.000000e+00> : vector<24x32xf32>
    %145 = tpu.matmul %143, %1, %cst_55 {dimension_numbers = #tpu.dot_dimension_numbers<[1], [0], [0], [1], [0, 0, 1, 1], [], []>} : vector<24x96xf32>, vector<96x32xf32>, vector<24x32xf32> -> vector<24x32xf32>
    %146 = tpu.reciprocal %145 {approx = true} : vector<24x32xf32> -> vector<24x32xf32>
    %147 = arith.mulf %144, %146 : vector<24x32xf32>
    %c1_56 = arith.constant 1 : index
    %c0_57 = arith.constant 0 : index
    %c0_58 = arith.constant 0 : index
    %148 = vector.load %arg3[%c1_56, %c0_57, %c0_58] : memref<2x32x32xf32, #tpu.memory_space<vmem>>, vector<1x32x32xf32>
    %149 = vector.shape_cast %148 : vector<1x32x32xf32> to vector<32x32xf32>
    %cst_59 = arith.constant dense<0.000000e+00> : vector<24x32xf32>
    %150 = tpu.matmul %147, %149, %cst_59 {dimension_numbers = #tpu.dot_dimension_numbers<[1], [0], [0], [1], [0, 0, 1, 1], [], []>} : vector<24x32xf32>, vector<32x32xf32>, vector<24x32xf32> -> vector<24x32xf32>
    %151 = arith.addf %102, %150 : vector<24x32xf32>
    %152 = vector.extract_strided_slice %104 {offsets = [4, 0], sizes = [1, 32], strides = [1, 1]} : vector<8x64xf32> to vector<1x32xf32>
    %153 = vector.broadcast %152 : vector<1x32xf32> to vector<24x32xf32>
    %154 = arith.addf %151, %153 : vector<24x32xf32>
    %155 = vector.extract_strided_slice %104 {offsets = [2, 0], sizes = [1, 32], strides = [1, 1]} : vector<8x64xf32> to vector<1x32xf32>
    %156 = vector.extract_strided_slice %104 {offsets = [3, 0], sizes = [1, 32], strides = [1, 1]} : vector<8x64xf32> to vector<1x32xf32>
    %cst_60 = arith.constant dense<0.000000e+00> : vector<24xf32>
    %157 = vector.multi_reduction <add>, %154, %cst_60 [1] : vector<24x32xf32> to vector<24xf32>
    %158 = vector.shape_cast %157 : vector<24xf32> to vector<24x1xf32>
    %cst_61 = arith.constant 3.200000e+01 : f32
    %159 = vector.broadcast %cst_61 : f32 to vector<24x1xf32>
    %160 = arith.divf %158, %159 : vector<24x1xf32>
    %161 = vector.broadcast %160 : vector<24x1xf32> to vector<24x32xf32>
    %162 = arith.subf %154, %161 : vector<24x32xf32>
    %163 = arith.mulf %162, %162 : vector<24x32xf32>
    %cst_62 = arith.constant dense<0.000000e+00> : vector<24xf32>
    %164 = vector.multi_reduction <add>, %163, %cst_62 [1] : vector<24x32xf32> to vector<24xf32>
    %165 = vector.shape_cast %164 : vector<24xf32> to vector<24x1xf32>
    %cst_63 = arith.constant 3.200000e+01 : f32
    %166 = vector.broadcast %cst_63 : f32 to vector<24x1xf32>
    %167 = arith.divf %165, %166 : vector<24x1xf32>
    %cst_64 = arith.constant 9.99999974E-6 : f32
    %168 = vector.broadcast %cst_64 : f32 to vector<24x1xf32>
    %169 = arith.addf %167, %168 : vector<24x1xf32>
    %170 = math.rsqrt %169 : vector<24x1xf32>
    %171 = vector.broadcast %170 : vector<24x1xf32> to vector<24x32xf32>
    %172 = arith.mulf %162, %171 : vector<24x32xf32>
    %173 = vector.broadcast %155 : vector<1x32xf32> to vector<24x32xf32>
    %174 = arith.mulf %172, %173 : vector<24x32xf32>
    %175 = vector.broadcast %156 : vector<1x32xf32> to vector<24x32xf32>
    %176 = arith.addf %174, %175 : vector<24x32xf32>
    %c1_65 = arith.constant 1 : index
    %c0_66 = arith.constant 0 : index
    %c0_67 = arith.constant 0 : index
    %177 = vector.load %arg4[%c1_65, %c0_66, %c0_67] : memref<2x32x64xf32, #tpu.memory_space<vmem>>, vector<1x32x64xf32>
    %178 = vector.shape_cast %177 : vector<1x32x64xf32> to vector<32x64xf32>
    %cst_68 = arith.constant dense<0.000000e+00> : vector<24x64xf32>
    %179 = tpu.matmul %176, %178, %cst_68 {dimension_numbers = #tpu.dot_dimension_numbers<[1], [0], [0], [1], [0, 0, 1, 1], [], []>} : vector<24x32xf32>, vector<32x64xf32>, vector<24x64xf32> -> vector<24x64xf32>
    %180 = vector.extract_strided_slice %104 {offsets = [5, 0], sizes = [1, 64], strides = [1, 1]} : vector<8x64xf32> to vector<1x64xf32>
    %181 = vector.broadcast %180 : vector<1x64xf32> to vector<24x64xf32>
    %182 = arith.addf %179, %181 : vector<24x64xf32>
    %183 = arith.mulf %182, %182 : vector<24x64xf32>
    %184 = arith.mulf %182, %183 : vector<24x64xf32>
    %cst_69 = arith.constant 4.471500e-02 : f32
    %185 = vector.broadcast %cst_69 : f32 to vector<24x64xf32>
    %186 = arith.mulf %185, %184 : vector<24x64xf32>
    %187 = arith.addf %182, %186 : vector<24x64xf32>
    %cst_70 = arith.constant 0.797884583 : f32
    %188 = vector.broadcast %cst_70 : f32 to vector<24x64xf32>
    %189 = arith.mulf %188, %187 : vector<24x64xf32>
    %190 = math.tanh %189 : vector<24x64xf32>
    %cst_71 = arith.constant 1.000000e+00 : f32
    %191 = vector.broadcast %cst_71 : f32 to vector<24x64xf32>
    %192 = arith.addf %191, %190 : vector<24x64xf32>
    %cst_72 = arith.constant 5.000000e-01 : f32
    %193 = vector.broadcast %cst_72 : f32 to vector<24x64xf32>
    %194 = arith.mulf %193, %192 : vector<24x64xf32>
    %195 = arith.mulf %182, %194 : vector<24x64xf32>
    %c1_73 = arith.constant 1 : index
    %c0_74 = arith.constant 0 : index
    %c0_75 = arith.constant 0 : index
    %196 = vector.load %arg5[%c1_73, %c0_74, %c0_75] : memref<2x64x32xf32, #tpu.memory_space<vmem>>, vector<1x64x32xf32>
    %197 = vector.shape_cast %196 : vector<1x64x32xf32> to vector<64x32xf32>
    %cst_76 = arith.constant dense<0.000000e+00> : vector<24x32xf32>
    %198 = tpu.matmul %195, %197, %cst_76 {dimension_numbers = #tpu.dot_dimension_numbers<[1], [0], [0], [1], [0, 0, 1, 1], [], []>} : vector<24x64xf32>, vector<64x32xf32>, vector<24x32xf32> -> vector<24x32xf32>
    %199 = arith.addf %154, %198 : vector<24x32xf32>
    %200 = vector.extract_strided_slice %104 {offsets = [6, 0], sizes = [1, 32], strides = [1, 1]} : vector<8x64xf32> to vector<1x32xf32>
    %201 = vector.broadcast %200 : vector<1x32xf32> to vector<24x32xf32>
    %202 = arith.addf %199, %201 : vector<24x32xf32>
    %c0_77 = arith.constant 0 : index
    %c0_78 = arith.constant 0 : index
    %203 = vector.load %arg7[%c0_77, %c0_78] : memref<32x128xf32, #tpu.memory_space<vmem>>, vector<32x128xf32>
    %cst_79 = arith.constant dense<0.000000e+00> : vector<24x128xf32>
    %204 = tpu.matmul %202, %203, %cst_79 {dimension_numbers = #tpu.dot_dimension_numbers<[1], [0], [0], [1], [0, 0, 1, 1], [], []>} : vector<24x32xf32>, vector<32x128xf32>, vector<24x128xf32> -> vector<24x128xf32>
    %c0_80 = arith.constant 0 : index
    %c0_81 = arith.constant 0 : index
    %205 = vector.load %arg8[%c0_80, %c0_81] : memref<1x128xf32, #tpu.memory_space<vmem>>, vector<1x128xf32>
    %206 = vector.broadcast %205 : vector<1x128xf32> to vector<24x128xf32>
    %207 = arith.addf %204, %206 : vector<24x128xf32>
    %c0_82 = arith.constant 0 : index
    %c0_83 = arith.constant 0 : index
    %208 = vector.load %arg11[%c0_82, %c0_83] : memref<24x128xf32, #tpu.memory_space<vmem>>, vector<24x128xf32>
    tpu.vector_store %arg11[%c0_82, %c0_83], %207 {strides = array<i32>} : memref<24x128xf32, #tpu.memory_space<vmem>>, vector<24x128xf32>,
    return
  }
  func.func @transform_0(%arg0: i32) -> (i32, i32) {
    %c0_i32 = arith.constant 0 : i32
    %c0_i32_0 = arith.constant 0 : i32
    %c0_i32_1 = arith.constant 0 : i32
    return %c0_i32, %c0_i32_0 : i32, i32
  }
  func.func @transform_1(%arg0: i32) -> (i32, i32, i32) {
    %c0_i32 = arith.constant 0 : i32
    %c0_i32_0 = arith.constant 0 : i32
    %c0_i32_1 = arith.constant 0 : i32
    %c0_i32_2 = arith.constant 0 : i32
    return %c0_i32, %c0_i32_0, %c0_i32_1 : i32, i32, i32
  }
  func.func @transform_2(%arg0: i32) -> (i32, i32, i32) {
    %c0_i32 = arith.constant 0 : i32
    %c0_i32_0 = arith.constant 0 : i32
    %c0_i32_1 = arith.constant 0 : i32
    %c0_i32_2 = arith.constant 0 : i32
    return %c0_i32, %c0_i32_0, %c0_i32_1 : i32, i32, i32
  }
  func.func @transform_3(%arg0: i32) -> (i32, i32, i32) {
    %c0_i32 = arith.constant 0 : i32
    %c0_i32_0 = arith.constant 0 : i32
    %c0_i32_1 = arith.constant 0 : i32
    %c0_i32_2 = arith.constant 0 : i32
    return %c0_i32, %c0_i32_0, %c0_i32_1 : i32, i32, i32
  }
  func.func @transform_4(%arg0: i32) -> (i32, i32, i32) {
    %c0_i32 = arith.constant 0 : i32
    %c0_i32_0 = arith.constant 0 : i32
    %c0_i32_1 = arith.constant 0 : i32
    %c0_i32_2 = arith.constant 0 : i32
    return %c0_i32, %c0_i32_0, %c0_i32_1 : i32, i32, i32
  }
  func.func @transform_5(%arg0: i32) -> (i32, i32, i32) {
    %c0_i32 = arith.constant 0 : i32
    %c0_i32_0 = arith.constant 0 : i32
    %c0_i32_1 = arith.constant 0 : i32
    %c0_i32_2 = arith.constant 0 : i32
    return %c0_i32, %c0_i32_0, %c0_i32_1 : i32, i32, i32
  }
  func.func @transform_6(%arg0: i32) -> (i32, i32) {
    %c0_i32 = arith.constant 0 : i32
    %c0_i32_0 = arith.constant 0 : i32
    %c0_i32_1 = arith.constant 0 : i32
    return %c0_i32, %c0_i32_0 : i32, i32
  }
  func.func @transform_7(%arg0: i32) -> (i32, i32) {
    %c0_i32 = arith.constant 0 : i32
    %c0_i32_0 = arith.constant 0 : i32
    %c0_i32_1 = arith.constant 0 : i32
    return %c0_i32, %c0_i32_0 : i32, i32
  }
  func.func @transform_8(%arg0: i32) -> (i32, i32) {
    %c0_i32 = arith.constant 0 : i32
    %c0_i32_0 = arith.constant 0 : i32
    %c0_i32_1 = arith.constant 0 : i32
    return %c0_i32, %c0_i32_0 : i32, i32
  }
  func.func @transform_9(%arg0: i32) -> (i32, i32) {
    %c0_i32 = arith.constant 0 : i32
    %c0_i32_0 = arith.constant 0 : i32
    %c0_i32_1 = arith.constant 0 : i32
    return %c0_i32, %c0_i32_0 : i32, i32
  }
  func.func @transform_10(%arg0: i32) -> (i32, i32) {
    %c0_i32 = arith.constant 0 : i32
    %c0_i32_0 = arith.constant 0 : i32
    %c0_i32_1 = arith.constant 0 : i32
    return %c0_i32, %c0_i32_0 : i32, i32
  }
}

</mosaic_0001>

<llo_original>
// kernel: glove_mixed_gussan_forward.3
$region0: #{glove_mixed_gussan_forward.3}
  #allocation0 [shape = 'u32[]', space=smem, size = 0x4, offset = 0x4, fixed_abs, tag = 'smem constant byte address 0x4 - core index']
  #allocation1 [shape = 'u32[144,128]{1,0:T(1,128)}', space=vmem, size = 0x12000, scoped, tag = 'internal scratch']
  %s0 = inlined_call_operand.vmem [shape: f32[24,32], index: 0, kind: input, shape index: {}]
  %s1 = inlined_call_operand.vmem [shape: f32[2,32,96], index: 1, kind: input, shape index: {}]
  %s2 = inlined_call_operand.vmem [shape: f32[2,32,32], index: 2, kind: input, shape index: {}]
  %s3 = inlined_call_operand.vmem [shape: f32[2,32,64], index: 3, kind: input, shape index: {}]
  %s4 = inlined_call_operand.vmem [shape: f32[2,64,32], index: 4, kind: input, shape index: {}]
  %s5 = inlined_call_operand.vmem [shape: f32[2,8,64], index: 5, kind: input, shape index: {}]
  %s6 = inlined_call_operand.vmem [shape: f32[32,128], index: 6, kind: input, shape index: {}]
  %s7 = inlined_call_operand.vmem [shape: f32[1,128], index: 7, kind: input, shape index: {}]
  %s8 = inlined_call_operand.vmem [shape: f32[96,32], index: 8, kind: input, shape index: {}]
  %s9 = inlined_call_operand.vmem [shape: f32[24,96], index: 9, kind: input, shape index: {}]
  %s10 = inlined_call_operand.vmem [shape: f32[24,128], index: 10, kind: output, shape index: {}]
  %s11 = sld [smem:[#allocation0]]
  $region50: #{glove_mixed_gussan_forward.3} parent=0
    _
  %s13 = ssub.s32 1, %s11
  %s14 = scalar_select 0, %s13, %s11
  // Predicated region
  $region2: #{glove_mixed_gussan_forward.3} parent=0 // pred_check
    _
  $region3: #{glove_mixed_gussan_forward.3} parent=0 // pred_check_branch
    %16 = sbr.rel (0) target = $region5
  $region4: #{glove_mixed_gussan_forward.3} parent=0 // pred_region
    _
  $region5: #{glove_mixed_gussan_forward.3} parent=0 // pred_fallthru
    _
  // Predicated region
  $region6: #{glove_mixed_gussan_forward.3} parent=0 // pred_check
    _
  $region7: #{glove_mixed_gussan_forward.3} parent=0 // pred_check_branch
    %18 = sbr.rel (0) target = $region9
  $region8: #{glove_mixed_gussan_forward.3} parent=0 // pred_region
    _
  $region9: #{glove_mixed_gussan_forward.3} parent=0 // pred_fallthru
    _
  // Predicated region
  $region10: #{glove_mixed_gussan_forward.3} parent=0 // pred_check
    _
  $region11: #{glove_mixed_gussan_forward.3} parent=0 // pred_check_branch
    %20 = sbr.rel (0) target = $region13
  $region12: #{glove_mixed_gussan_forward.3} parent=0 // pred_region
    _
  $region13: #{glove_mixed_gussan_forward.3} parent=0 // pred_fallthru
    _
  // Predicated region
  $region14: #{glove_mixed_gussan_forward.3} parent=0 // pred_check
    _
  $region15: #{glove_mixed_gussan_forward.3} parent=0 // pred_check_branch
    %22 = sbr.rel (0) target = $region17
  $region16: #{glove_mixed_gussan_forward.3} parent=0 // pred_region
    _
  $region17: #{glove_mixed_gussan_forward.3} parent=0 // pred_fallthru
    _
  // Predicated region
  $region18: #{glove_mixed_gussan_forward.3} parent=0 // pred_check
    _
  $region19: #{glove_mixed_gussan_forward.3} parent=0 // pred_check_branch
    %24 = sbr.rel (0) target = $region21
  $region20: #{glove_mixed_gussan_forward.3} parent=0 // pred_region
    _
  $region21: #{glove_mixed_gussan_forward.3} parent=0 // pred_fallthru
    _
  // Predicated region
  $region22: #{glove_mixed_gussan_forward.3} parent=0 // pred_check
    _
  $region23: #{glove_mixed_gussan_forward.3} parent=0 // pred_check_branch
    %26 = sbr.rel (0) target = $region25
  $region24: #{glove_mixed_gussan_forward.3} parent=0 // pred_region
    _
  $region25: #{glove_mixed_gussan_forward.3} parent=0 // pred_fallthru
    _
  // Predicated region
  $region26: #{glove_mixed_gussan_forward.3} parent=0 // pred_check
    _
  $region27: #{glove_mixed_gussan_forward.3} parent=0 // pred_check_branch
    %28 = sbr.rel (0) target = $region29
  $region28: #{glove_mixed_gussan_forward.3} parent=0 // pred_region
    _
  $region29: #{glove_mixed_gussan_forward.3} parent=0 // pred_fallthru
    _
  // Predicated region
  $region30: #{glove_mixed_gussan_forward.3} parent=0 // pred_check
    _
  $region31: #{glove_mixed_gussan_forward.3} parent=0 // pred_check_branch
    %30 = sbr.rel (0) target = $region33
  $region32: #{glove_mixed_gussan_forward.3} parent=0 // pred_region
    _
  $region33: #{glove_mixed_gussan_forward.3} parent=0 // pred_fallthru
    _
  // Predicated region
  $region34: #{glove_mixed_gussan_forward.3} parent=0 // pred_check
    _
  $region35: #{glove_mixed_gussan_forward.3} parent=0 // pred_check_branch
    %32 = sbr.rel (0) target = $region37
  $region36: #{glove_mixed_gussan_forward.3} parent=0 // pred_region
    _
  $region37: #{glove_mixed_gussan_forward.3} parent=0 // pred_fallthru
    _
  // Predicated region
  $region38: #{glove_mixed_gussan_forward.3} parent=0 // pred_check
    _
  $region39: #{glove_mixed_gussan_forward.3} parent=0 // pred_check_branch
    %34 = sbr.rel (0) target = $region41
  $region40: #{glove_mixed_gussan_forward.3} parent=0 // pred_region
    _
  $region41: #{glove_mixed_gussan_forward.3} parent=0 // pred_fallthru
    _
  %v35 = vld [vmem:[%s0] sm:$0xff]
  %v36 = vld [vmem:[%s0 + $0x8] sm:$0xff]
  %v37 = vld [vmem:[%s0 + $0x10] sm:$0xff]
  %v38 = vld [vmem:[%s8] sm:$0xff]
  %v39 = vld [vmem:[%s8 + $0x8] sm:$0xff]
  %v40 = vld [vmem:[%s8 + $0x10] sm:$0xff]
  %v41 = vld [vmem:[%s8 + $0x18] sm:$0xff]
  %v42 = vld [vmem:[%s8 + $0x20] sm:$0xff]
  %v43 = vld [vmem:[%s8 + $0x28] sm:$0xff]
  %v44 = vld [vmem:[%s8 + $0x30] sm:$0xff]
  %v45 = vld [vmem:[%s8 + $0x38] sm:$0xff]
  %v46 = vld [vmem:[%s8 + $0x40] sm:$0xff]
  %v47 = vld [vmem:[%s8 + $0x48] sm:$0xff]
  %v48 = vld [vmem:[%s8 + $0x50] sm:$0xff]
  %v49 = vld [vmem:[%s8 + $0x58] sm:$0xff]
  %v50 = vld [vmem:[%s9] sm:$0xff]
  %v51 = vld [vmem:[%s9 + $0x8] sm:$0xff]
  %v52 = vld [vmem:[%s9 + $0x10] sm:$0xff]
  %v53 = vld [vmem:[%s5] sm:$0xff]
  %vm54 = vcmask 261120
  %v55 = vsel %vm54, %v35, 0.0
  %56 = vadd.xlane.f32.xlu0 %v55
  %v57 = vpop.xlane.xlu0 %56
  %v58 = vsel %vm54, %v36, 0.0
  %59 = vadd.xlane.f32.xlu0 %v58
  %v60 = vpop.xlane.xlu0 %59
  %v61 = vsel %vm54, %v37, 0.0
  %62 = vadd.xlane.f32.xlu0 %v61
  %v63 = vpop.xlane.xlu0 %62
  %v64 = vrcp.pop 32.0
  %v65 = vmul.f32 %v57, %v64
  %v66 = vmul.f32 %v60, %v64
  %v67 = vmul.f32 %v63, %v64
  %v68 = vsub.f32 %v35, %v65
  %v69 = vsub.f32 %v36, %v66
  %v70 = vsub.f32 %v37, %v67
  %v71 = vmul.f32 %v68, %v68
  %v72 = vmul.f32 %v69, %v69
  %v73 = vmul.f32 %v70, %v70
  %v74 = vsel %vm54, %v71, 0.0
  %75 = vadd.xlane.f32.xlu0 %v74
  %v76 = vpop.xlane.xlu0 %75
  %v77 = vsel %vm54, %v72, 0.0
  %78 = vadd.xlane.f32.xlu0 %v77
  %v79 = vpop.xlane.xlu0 %78
  %v80 = vsel %vm54, %v73, 0.0
  %81 = vadd.xlane.f32.xlu0 %v80
  %v82 = vpop.xlane.xlu0 %81
  %v83 = vmul.f32 %v76, %v64
  %v84 = vmul.f32 %v79, %v64
  %v85 = vmul.f32 %v82, %v64
  %v86 = vadd.f32 %v83, 1e-05
  %v87 = vadd.f32 %v84, 1e-05
  %v88 = vadd.f32 %v85, 1e-05
  %v89 = vrsqrt.pop %v86
  %v90 = vrsqrt.pop %v87
  %v91 = vrsqrt.pop %v88
  %v92 = vmul.f32 %v68, %v89
  %v93 = vmul.f32 %v69, %v90
  %v94 = vmul.f32 %v70, %v91
  %v95 = vlaneseq
  %v96 = vshrl.u32 %v95, 7
  %v97 = vsub.s32 0, %v96
  %v98 = vrot.slane %v53, %v97
  %v99 = vmul.f32 %v92, %v98
  %v100 = vmul.f32 %v93, %v98
  %v101 = vmul.f32 %v94, %v98
  %v102 = vlaneseq
  %v103 = vshrl.u32 %v102, 7
  %v104 = vsub.s32 1, %v103
  %v105 = vrot.slane %v53, %v104
  %v106 = vadd.f32 %v99, %v105
  %v107 = vadd.f32 %v100, %v105
  %v108 = vadd.f32 %v101, %v105
  %v109 = vld [vmem:[%s1] sm:$0xff]
  %v110 = vld [vmem:[%s1 + $0x8] sm:$0xff]
  %v111 = vld [vmem:[%s1 + $0x10] sm:$0xff]
  %v112 = vld [vmem:[%s1 + $0x18] sm:$0xff]
  %v114 = vsel %vm54, %v106, 0
  %v117 = vsel %vm54, %v107, 0
  %v120 = vsel %vm54, %v108, 0
  %122 = vmatprep.subr.mxu0 0.0
  %123 = vmatpush1.msra.mxu0 %v109
  %124 = vmatprep.subr.mxu0 0.0
  %125 = vmatpush1.msra.mxu0 %v110
  %126 = vmatprep.subr.mxu0 0.0
  %127 = vmatpush1.msra.mxu0 %v111
  %128 = vmatprep.subr.mxu0 0.0
  %129 = vmatpush1.msra.mxu0 %v112
  %130 = vmatprep.subr.mxu0 0.0
  %131 = vmatpush1.msra.mxu0 0.0
  %132 = vmatprep.subr.mxu0 0.0
  %133 = vmatpush1.msra.mxu0 0.0
  %134 = vmatprep.subr.mxu0 0.0
  %135 = vmatpush1.msra.mxu0 0.0
  %136 = vmatprep.subr.mxu0 0.0
  %137 = vmatpush1.msra.mxu0 0.0
  %138 = vmatprep.subr.mxu0 0.0
  %139 = vmatpush1.msra.mxu0 0.0
  %140 = vmatprep.subr.mxu0 0.0
  %141 = vmatpush1.msra.mxu0 0.0
  %142 = vmatprep.subr.mxu0 0.0
  %143 = vmatpush1.msra.mxu0 0.0
  %144 = vmatprep.subr.mxu0 0.0
  %145 = vmatpush1.msra.mxu0 0.0
  %146 = vmatprep.subr.mxu0 0.0
  %147 = vmatpush1.msra.mxu0 0.0
  %148 = vmatprep.subr.mxu0 0.0
  %149 = vmatpush1.msra.mxu0 0.0
  %150 = vmatprep.subr.mxu0 0.0
  %151 = vmatpush1.msra.mxu0 0.0
  %152 = vmatprep.subr.mxu0 0.0
  %153 = vmatpush1.msra.mxu0 0.0
  %154 = vmatprep.subr.mxu0 0.0
  %155 = vmatpush1.msra.mxu0 0.0
  %156 = vmatprep.subr.mxu0 0.0
  %157 = vmatpush1.msra.mxu0 0.0
  %158 = vmatprep.subr.mxu0 0.0
  %159 = vmatpush1.msra.mxu0 0.0
  %160 = vmatprep.subr.mxu0 0.0
  %161 = vmatpush1.msra.mxu0 0.0
  %162 = vmatprep.subr.mxu0 0.0
  %163 = vmatpush1.msra.mxu0 0.0
  %164 = vmatprep.subr.mxu0 0.0
  %165 = vmatpush1.msra.mxu0 0.0
  %166 = vmatprep.subr.mxu0 0.0
  %167 = vmatpush1.msra.mxu0 0.0
  %168 = vmatprep.subr.mxu0 0.0
  %169 = vmatpush1.msra.mxu0 0.0
  %170 = vmatprep.subr.mxu0 0.0
  %171 = vmatpush1.msra.mxu0 0.0
  %172 = vmatprep.subr.mxu0 0.0
  %173 = vmatpush1.msra.mxu0 0.0
  %174 = vmatprep.subr.mxu0 0.0
  %175 = vmatpush1.msra.mxu0 0.0
  %176 = vmatprep.subr.mxu0 0.0
  %177 = vmatpush1.msra.mxu0 0.0
  %178 = vmatprep.subr.mxu0 0.0
  %179 = vmatpush1.msra.mxu0 0.0
  %180 = vmatprep.subr.mxu0 0.0
  %181 = vmatpush1.msra.mxu0 0.0
  %182 = vmatprep.subr.mxu0 0.0
  %183 = vmatpush1.msra.mxu0 0.0
  %184 = vmatprep.subr.mxu0 0.0
  %185 = vmatpush1.msra.mxu0 0.0
  %186 = vmatprep.mubr.f32.mxu0 0.0
  %187 = vmatmul.mubr.f32.gmra.mrb[0].mxu0 %v114
  %v188 = vpop.f32.mrb[0].mxu0
  %v189 = vadd.f32 0.0, %v188
  %v190 = vpop.f32.mrb[0].mxu0
  %191 = vmatprep.mubr.f32.mxu0 0.0
  %192 = vmatmul.mubr.f32.gmra.mrb[0].mxu0 %v117
  %v193 = vpop.f32.mrb[0].mxu0
  %v194 = vadd.f32 0.0, %v193
  %v195 = vpop.f32.mrb[0].mxu0
  %196 = vmatprep.mubr.f32.mxu0 0.0
  %197 = vmatmul.mubr.f32.gmra.mrb[0].mxu0 %v120
  %v198 = vpop.f32.mrb[0].mxu0
  %v199 = vadd.f32 0.0, %v198
  %v200 = vpop.f32.mrb[0].mxu0
  %201 = vdwg.mxu0
  %214 = vrot.lane.b32.xlu0 %v38, 32
  %v215 = vpop.permute.xlu0 %214
  %216 = vrot.lane.b32.xlu0 %v39, 32
  %v217 = vpop.permute.xlu0 %216
  %218 = vrot.lane.b32.xlu0 %v40, 32
  %v219 = vpop.permute.xlu0 %218
  %220 = vrot.lane.b32.xlu0 %v41, 32
  %v221 = vpop.permute.xlu0 %220
  %222 = vrot.lane.b32.xlu0 %v42, 32
  %v223 = vpop.permute.xlu0 %222
  %224 = vrot.lane.b32.xlu0 %v43, 32
  %v225 = vpop.permute.xlu0 %224
  %226 = vrot.lane.b32.xlu0 %v44, 32
  %v227 = vpop.permute.xlu0 %226
  %228 = vrot.lane.b32.xlu0 %v45, 32
  %v229 = vpop.permute.xlu0 %228
  %230 = vrot.lane.b32.xlu0 %v46, 32
  %v231 = vpop.permute.xlu0 %230
  %232 = vrot.lane.b32.xlu0 %v47, 32
  %v233 = vpop.permute.xlu0 %232
  %234 = vrot.lane.b32.xlu0 %v48, 32
  %v235 = vpop.permute.xlu0 %234
  %236 = vrot.lane.b32.xlu0 %v49, 32
  %v237 = vpop.permute.xlu0 %236
  %v250 = vmul.f32 %v189, %v215
  %v251 = vmul.f32 %v194, %v217
  %v252 = vmul.f32 %v199, %v219
  %v253 = vmul.f32 %v189, %v221
  %v254 = vmul.f32 %v194, %v223
  %v255 = vmul.f32 %v199, %v225
  %v256 = vmul.f32 %v189, %v227
  %v257 = vmul.f32 %v194, %v229
  %v258 = vmul.f32 %v199, %v231
  %v259 = vmul.f32 %v189, %v233
  %v260 = vmul.f32 %v194, %v235
  %v261 = vmul.f32 %v199, %v237
  %262 = vrot.lane.b32.xlu0 %v38, 64
  %v263 = vpop.permute.xlu0 %262
  %264 = vrot.lane.b32.xlu0 %v39, 64
  %v265 = vpop.permute.xlu0 %264
  %266 = vrot.lane.b32.xlu0 %v40, 64
  %v267 = vpop.permute.xlu0 %266
  %268 = vrot.lane.b32.xlu0 %v41, 64
  %v269 = vpop.permute.xlu0 %268
  %270 = vrot.lane.b32.xlu0 %v42, 64
  %v271 = vpop.permute.xlu0 %270
  %272 = vrot.lane.b32.xlu0 %v43, 64
  %v273 = vpop.permute.xlu0 %272
  %274 = vrot.lane.b32.xlu0 %v44, 64
  %v275 = vpop.permute.xlu0 %274
  %276 = vrot.lane.b32.xlu0 %v45, 64
  %v277 = vpop.permute.xlu0 %276
  %278 = vrot.lane.b32.xlu0 %v46, 64
  %v279 = vpop.permute.xlu0 %278
  %280 = vrot.lane.b32.xlu0 %v47, 64
  %v281 = vpop.permute.xlu0 %280
  %282 = vrot.lane.b32.xlu0 %v48, 64
  %v283 = vpop.permute.xlu0 %282
  %284 = vrot.lane.b32.xlu0 %v49, 64
  %v285 = vpop.permute.xlu0 %284
  %v298 = vmul.f32 %v189, %v263
  %v299 = vmul.f32 %v194, %v265
  %v300 = vmul.f32 %v199, %v267
  %v301 = vmul.f32 %v189, %v269
  %v302 = vmul.f32 %v194, %v271
  %v303 = vmul.f32 %v199, %v273
  %v304 = vmul.f32 %v189, %v275
  %v305 = vmul.f32 %v194, %v277
  %v306 = vmul.f32 %v199, %v279
  %v307 = vmul.f32 %v189, %v281
  %v308 = vmul.f32 %v194, %v283
  %v309 = vmul.f32 %v199, %v285
  %322 = vrot.lane.b32.xlu0 %v250, 96
  %v323 = vpop.permute.xlu0 %322
  %324 = vrot.lane.b32.xlu0 %v251, 96
  %v325 = vpop.permute.xlu0 %324
  %326 = vrot.lane.b32.xlu0 %v252, 96
  %v327 = vpop.permute.xlu0 %326
  %328 = vrot.lane.b32.xlu0 %v253, 96
  %v329 = vpop.permute.xlu0 %328
  %330 = vrot.lane.b32.xlu0 %v254, 96
  %v331 = vpop.permute.xlu0 %330
  %332 = vrot.lane.b32.xlu0 %v255, 96
  %v333 = vpop.permute.xlu0 %332
  %334 = vrot.lane.b32.xlu0 %v256, 96
  %v335 = vpop.permute.xlu0 %334
  %336 = vrot.lane.b32.xlu0 %v257, 96
  %v337 = vpop.permute.xlu0 %336
  %338 = vrot.lane.b32.xlu0 %v258, 96
  %v339 = vpop.permute.xlu0 %338
  %340 = vrot.lane.b32.xlu0 %v259, 96
  %v341 = vpop.permute.xlu0 %340
  %342 = vrot.lane.b32.xlu0 %v260, 96
  %v343 = vpop.permute.xlu0 %342
  %344 = vrot.lane.b32.xlu0 %v261, 96
  %v345 = vpop.permute.xlu0 %344
  %v347 = vsel %vm54, %v189, 0
  %v350 = vsel %vm54, %v194, 0
  %v353 = vsel %vm54, %v199, 0
  %v355 = vsel %vm54, %v323, 0
  %v357 = vsel %vm54, %v325, 0
  %v359 = vsel %vm54, %v327, 0
  %v361 = vsel %vm54, %v329, 0
  %v363 = vsel %vm54, %v331, 0
  %v365 = vsel %vm54, %v333, 0
  %v367 = vsel %vm54, %v335, 0
  %v369 = vsel %vm54, %v337, 0
  %v371 = vsel %vm54, %v339, 0
  %v373 = vsel %vm54, %v341, 0
  %v375 = vsel %vm54, %v343, 0
  %v377 = vsel %vm54, %v345, 0
  %379 = vmatprep.subr.mxu0 0.0
  %380 = vmatpush1.xpose.msra.mxu0 %v355
  %381 = vmatprep.subr.mxu0 0.0
  %382 = vmatpush1.xpose.msra.mxu0 %v357
  %383 = vmatprep.subr.mxu0 0.0
  %384 = vmatpush1.xpose.msra.mxu0 %v359
  %385 = vmatprep.subr.mxu0 0.0
  %386 = vmatpush1.xpose.msra.mxu0 %v361
  %387 = vmatprep.subr.mxu0 0.0
  %388 = vmatpush1.xpose.msra.mxu0 %v363
  %389 = vmatprep.subr.mxu0 0.0
  %390 = vmatpush1.xpose.msra.mxu0 %v365
  %391 = vmatprep.subr.mxu0 0.0
  %392 = vmatpush1.xpose.msra.mxu0 %v367
  %393 = vmatprep.subr.mxu0 0.0
  %394 = vmatpush1.xpose.msra.mxu0 %v369
  %395 = vmatprep.subr.mxu0 0.0
  %396 = vmatpush1.xpose.msra.mxu0 %v371
  %397 = vmatprep.subr.mxu0 0.0
  %398 = vmatpush1.xpose.msra.mxu0 %v373
  %399 = vmatprep.subr.mxu0 0.0
  %400 = vmatpush1.xpose.msra.mxu0 %v375
  %401 = vmatprep.subr.mxu0 0.0
  %402 = vmatpush1.xpose.msra.mxu0 %v377
  %403 = vmatprep.subr.mxu0 0.0
  %404 = vmatpush1.xpose.msra.mxu0 0.0
  %405 = vmatprep.subr.mxu0 0.0
  %406 = vmatpush1.xpose.msra.mxu0 0.0
  %407 = vmatprep.subr.mxu0 0.0
  %408 = vmatpush1.xpose.msra.mxu0 0.0
  %409 = vmatprep.subr.mxu0 0.0
  %410 = vmatpush1.xpose.msra.mxu0 0.0
  %411 = vmatprep.subr.mxu0 0.0
  %412 = vmatpush1.xpose.msra.mxu0 0.0
  %413 = vmatprep.subr.mxu0 0.0
  %414 = vmatpush1.xpose.msra.mxu0 0.0
  %415 = vmatprep.subr.mxu0 0.0
  %416 = vmatpush1.xpose.msra.mxu0 0.0
  %417 = vmatprep.subr.mxu0 0.0
  %418 = vmatpush1.xpose.msra.mxu0 0.0
  %419 = vmatprep.subr.mxu0 0.0
  %420 = vmatpush1.xpose.msra.mxu0 0.0
  %421 = vmatprep.subr.mxu0 0.0
  %422 = vmatpush1.xpose.msra.mxu0 0.0
  %423 = vmatprep.subr.mxu0 0.0
  %424 = vmatpush1.xpose.msra.mxu0 0.0
  %425 = vmatprep.subr.mxu0 0.0
  %426 = vmatpush1.xpose.msra.mxu0 0.0
  %427 = vmatprep.subr.mxu0 0.0
  %428 = vmatpush1.xpose.msra.mxu0 0.0
  %429 = vmatprep.subr.mxu0 0.0
  %430 = vmatpush1.xpose.msra.mxu0 0.0
  %431 = vmatprep.subr.mxu0 0.0
  %432 = vmatpush1.xpose.msra.mxu0 0.0
  %433 = vmatprep.subr.mxu0 0.0
  %434 = vmatpush1.xpose.msra.mxu0 0.0
  %435 = vmatprep.subr.mxu0 0.0
  %436 = vmatpush1.xpose.msra.mxu0 0.0
  %437 = vmatprep.subr.mxu0 0.0
  %438 = vmatpush1.xpose.msra.mxu0 0.0
  %439 = vmatprep.subr.mxu0 0.0
  %440 = vmatpush1.xpose.msra.mxu0 0.0
  %441 = vmatprep.subr.mxu0 0.0
  %442 = vmatpush1.xpose.msra.mxu0 0.0
  %443 = vmatprep.mubr.f32.mxu0 0.0
  %444 = vmatmul.mubr.f32.gmra.mrb[0].mxu0 %v347
  %v445 = vpop.f32.mrb[0].mxu0
  %v446 = vadd.f32 %v50, %v445
  %v447 = vpop.f32.mrb[0].mxu0
  %448 = vmatprep.mubr.f32.mxu0 0.0
  %449 = vmatmul.mubr.f32.gmra.mrb[0].mxu0 %v350
  %v450 = vpop.f32.mrb[0].mxu0
  %v451 = vadd.f32 %v51, %v450
  %v452 = vpop.f32.mrb[0].mxu0
  %453 = vmatprep.mubr.f32.mxu0 0.0
  %454 = vmatmul.mubr.f32.gmra.mrb[0].mxu0 %v353
  %v455 = vpop.f32.mrb[0].mxu0
  %v456 = vadd.f32 %v52, %v455
  %v457 = vpop.f32.mrb[0].mxu0
  %458 = vdwg.mxu0
  %vm459 = vcmask 785408
  %v460 = vsel %vm459, %v446, -inf
  %461 = vmax.xlane.f32.xlu0 %v460
  %v462 = vpop.xlane.xlu0 %461
  %v463 = vsel %vm459, %v451, -inf
  %464 = vmax.xlane.f32.xlu0 %v463
  %v465 = vpop.xlane.xlu0 %464
  %v466 = vsel %vm459, %v456, -inf
  %467 = vmax.xlane.f32.xlu0 %v466
  %v468 = vpop.xlane.xlu0 %467
  %v469 = vsub.f32 %v446, %v462
  %v470 = vsub.f32 %v451, %v465
  %v471 = vsub.f32 %v456, %v468
  %v472 = vmul.f32 %v469, 1.442695
  %v473 = vpow.pop %v472
  %v474 = vmul.f32 %v470, 1.442695
  %v475 = vpow.pop %v474
  %v476 = vmul.f32 %v471, 1.442695
  %v477 = vpow.pop %v476
  %490 = vrot.lane.b32.xlu0 %v298, 64
  %v491 = vpop.permute.xlu0 %490
  %492 = vrot.lane.b32.xlu0 %v299, 64
  %v493 = vpop.permute.xlu0 %492
  %494 = vrot.lane.b32.xlu0 %v300, 64
  %v495 = vpop.permute.xlu0 %494
  %496 = vrot.lane.b32.xlu0 %v301, 64
  %v497 = vpop.permute.xlu0 %496
  %498 = vrot.lane.b32.xlu0 %v302, 64
  %v499 = vpop.permute.xlu0 %498
  %500 = vrot.lane.b32.xlu0 %v303, 64
  %v501 = vpop.permute.xlu0 %500
  %502 = vrot.lane.b32.xlu0 %v304, 64
  %v503 = vpop.permute.xlu0 %502
  %504 = vrot.lane.b32.xlu0 %v305, 64
  %v505 = vpop.permute.xlu0 %504
  %506 = vrot.lane.b32.xlu0 %v306, 64
  %v507 = vpop.permute.xlu0 %506
  %508 = vrot.lane.b32.xlu0 %v307, 64
  %v509 = vpop.permute.xlu0 %508
  %510 = vrot.lane.b32.xlu0 %v308, 64
  %v511 = vpop.permute.xlu0 %510
  %512 = vrot.lane.b32.xlu0 %v309, 64
  %v513 = vpop.permute.xlu0 %512
  %v527 = vsel %vm459, %v473, 0
  %v530 = vsel %vm459, %v475, 0
  %v533 = vsel %vm459, %v477, 0
  %535 = vmatprep.subr.mxu0 0.0
  %536 = vmatpush1.msra.mxu0 %v491
  %537 = vmatprep.subr.mxu0 0.0
  %538 = vmatpush1.msra.mxu0 %v493
  %539 = vmatprep.subr.mxu0 0.0
  %540 = vmatpush1.msra.mxu0 %v495
  %541 = vmatprep.subr.mxu0 0.0
  %542 = vmatpush1.msra.mxu0 %v497
  %543 = vmatprep.subr.mxu0 0.0
  %544 = vmatpush1.msra.mxu0 %v499
  %545 = vmatprep.subr.mxu0 0.0
  %546 = vmatpush1.msra.mxu0 %v501
  %547 = vmatprep.subr.mxu0 0.0
  %548 = vmatpush1.msra.mxu0 %v503
  %549 = vmatprep.subr.mxu0 0.0
  %550 = vmatpush1.msra.mxu0 %v505
  %551 = vmatprep.subr.mxu0 0.0
  %552 = vmatpush1.msra.mxu0 %v507
  %553 = vmatprep.subr.mxu0 0.0
  %554 = vmatpush1.msra.mxu0 %v509
  %555 = vmatprep.subr.mxu0 0.0
  %556 = vmatpush1.msra.mxu0 %v511
  %557 = vmatprep.subr.mxu0 0.0
  %558 = vmatpush1.msra.mxu0 %v513
  %559 = vmatprep.subr.mxu0 0.0
  %560 = vmatpush1.msra.mxu0 0.0
  %561 = vmatprep.subr.mxu0 0.0
  %562 = vmatpush1.msra.mxu0 0.0
  %563 = vmatprep.subr.mxu0 0.0
  %564 = vmatpush1.msra.mxu0 0.0
  %565 = vmatprep.subr.mxu0 0.0
  %566 = vmatpush1.msra.mxu0 0.0
  %567 = vmatprep.subr.mxu0 0.0
  %568 = vmatpush1.msra.mxu0 0.0
  %569 = vmatprep.subr.mxu0 0.0
  %570 = vmatpush1.msra.mxu0 0.0
  %571 = vmatprep.subr.mxu0 0.0
  %572 = vmatpush1.msra.mxu0 0.0
  %573 = vmatprep.subr.mxu0 0.0
  %574 = vmatpush1.msra.mxu0 0.0
  %575 = vmatprep.subr.mxu0 0.0
  %576 = vmatpush1.msra.mxu0 0.0
  %577 = vmatprep.subr.mxu0 0.0
  %578 = vmatpush1.msra.mxu0 0.0
  %579 = vmatprep.subr.mxu0 0.0
  %580 = vmatpush1.msra.mxu0 0.0
  %581 = vmatprep.subr.mxu0 0.0
  %582 = vmatpush1.msra.mxu0 0.0
  %583 = vmatprep.subr.mxu0 0.0
  %584 = vmatpush1.msra.mxu0 0.0
  %585 = vmatprep.subr.mxu0 0.0
  %586 = vmatpush1.msra.mxu0 0.0
  %587 = vmatprep.subr.mxu0 0.0
  %588 = vmatpush1.msra.mxu0 0.0
  %589 = vmatprep.subr.mxu0 0.0
  %590 = vmatpush1.msra.mxu0 0.0
  %591 = vmatprep.subr.mxu0 0.0
  %592 = vmatpush1.msra.mxu0 0.0
  %593 = vmatprep.subr.mxu0 0.0
  %594 = vmatpush1.msra.mxu0 0.0
  %595 = vmatprep.subr.mxu0 0.0
  %596 = vmatpush1.msra.mxu0 0.0
  %597 = vmatprep.subr.mxu0 0.0
  %598 = vmatpush1.msra.mxu0 0.0
  %599 = vmatprep.mubr.f32.mxu0 0.0
  %600 = vmatmul.mubr.f32.gmra.mrb[0].mxu0 %v527
  %v601 = vpop.f32.mrb[0].mxu0
  %v602 = vadd.f32 0.0, %v601
  %v603 = vpop.f32.mrb[0].mxu0
  %604 = vmatprep.mubr.f32.mxu0 0.0
  %605 = vmatmul.mubr.f32.gmra.mrb[0].mxu0 %v530
  %v606 = vpop.f32.mrb[0].mxu0
  %v607 = vadd.f32 0.0, %v606
  %v608 = vpop.f32.mrb[0].mxu0
  %609 = vmatprep.mubr.f32.mxu0 0.0
  %610 = vmatmul.mubr.f32.gmra.mrb[0].mxu0 %v533
  %v611 = vpop.f32.mrb[0].mxu0
  %v612 = vadd.f32 0.0, %v611
  %v613 = vpop.f32.mrb[0].mxu0
  %614 = vdwg.mxu0
  %615 = vmatprep.subr.mxu0 0.0
  %616 = vmatpush1.msra.mxu0 %v38
  %617 = vmatprep.subr.mxu0 0.0
  %618 = vmatpush1.msra.mxu0 %v39
  %619 = vmatprep.subr.mxu0 0.0
  %620 = vmatpush1.msra.mxu0 %v40
  %621 = vmatprep.subr.mxu0 0.0
  %622 = vmatpush1.msra.mxu0 %v41
  %623 = vmatprep.subr.mxu0 0.0
  %624 = vmatpush1.msra.mxu0 %v42
  %625 = vmatprep.subr.mxu0 0.0
  %626 = vmatpush1.msra.mxu0 %v43
  %627 = vmatprep.subr.mxu0 0.0
  %628 = vmatpush1.msra.mxu0 %v44
  %629 = vmatprep.subr.mxu0 0.0
  %630 = vmatpush1.msra.mxu0 %v45
  %631 = vmatprep.subr.mxu0 0.0
  %632 = vmatpush1.msra.mxu0 %v46
  %633 = vmatprep.subr.mxu0 0.0
  %634 = vmatpush1.msra.mxu0 %v47
  %635 = vmatprep.subr.mxu0 0.0
  %636 = vmatpush1.msra.mxu0 %v48
  %637 = vmatprep.subr.mxu0 0.0
  %638 = vmatpush1.msra.mxu0 %v49
  %639 = vmatprep.subr.mxu0 0.0
  %640 = vmatpush1.msra.mxu0 0.0
  %641 = vmatprep.subr.mxu0 0.0
  %642 = vmatpush1.msra.mxu0 0.0
  %643 = vmatprep.subr.mxu0 0.0
  %644 = vmatpush1.msra.mxu0 0.0
  %645 = vmatprep.subr.mxu0 0.0
  %646 = vmatpush1.msra.mxu0 0.0
  %647 = vmatprep.subr.mxu0 0.0
  %648 = vmatpush1.msra.mxu0 0.0
  %649 = vmatprep.subr.mxu0 0.0
  %650 = vmatpush1.msra.mxu0 0.0
  %651 = vmatprep.subr.mxu0 0.0
  %652 = vmatpush1.msra.mxu0 0.0
  %653 = vmatprep.subr.mxu0 0.0
  %654 = vmatpush1.msra.mxu0 0.0
  %655 = vmatprep.subr.mxu0 0.0
  %656 = vmatpush1.msra.mxu0 0.0
  %657 = vmatprep.subr.mxu0 0.0
  %658 = vmatpush1.msra.mxu0 0.0
  %659 = vmatprep.subr.mxu0 0.0
  %660 = vmatpush1.msra.mxu0 0.0
  %661 = vmatprep.subr.mxu0 0.0
  %662 = vmatpush1.msra.mxu0 0.0
  %663 = vmatprep.subr.mxu0 0.0
  %664 = vmatpush1.msra.mxu0 0.0
  %665 = vmatprep.subr.mxu0 0.0
  %666 = vmatpush1.msra.mxu0 0.0
  %667 = vmatprep.subr.mxu0 0.0
  %668 = vmatpush1.msra.mxu0 0.0
  %669 = vmatprep.subr.mxu0 0.0
  %670 = vmatpush1.msra.mxu0 0.0
  %671 = vmatprep.subr.mxu0 0.0
  %672 = vmatpush1.msra.mxu0 0.0
  %673 = vmatprep.subr.mxu0 0.0
  %674 = vmatpush1.msra.mxu0 0.0
  %675 = vmatprep.subr.mxu0 0.0
  %676 = vmatpush1.msra.mxu0 0.0
  %677 = vmatprep.subr.mxu0 0.0
  %678 = vmatpush1.msra.mxu0 0.0
  %679 = vmatprep.mubr.f32.mxu0 0.0
  %680 = vmatmul.mubr.f32.gmra.mrb[0].mxu0 %v527
  %v681 = vpop.f32.mrb[0].mxu0
  %v682 = vadd.f32 0.0, %v681
  %v683 = vpop.f32.mrb[0].mxu0
  %684 = vmatprep.mubr.f32.mxu0 0.0
  %685 = vmatmul.mubr.f32.gmra.mrb[0].mxu0 %v530
  %v686 = vpop.f32.mrb[0].mxu0
  %v687 = vadd.f32 0.0, %v686
  %v688 = vpop.f32.mrb[0].mxu0
  %689 = vmatprep.mubr.f32.mxu0 0.0
  %690 = vmatmul.mubr.f32.gmra.mrb[0].mxu0 %v533
  %v691 = vpop.f32.mrb[0].mxu0
  %v692 = vadd.f32 0.0, %v691
  %v693 = vpop.f32.mrb[0].mxu0
  %694 = vdwg.mxu0
  %v695 = vrcp.pop %v682
  %v696 = vrcp.pop %v687
  %v697 = vrcp.pop %v692
  %v698 = vmul.f32 %v602, %v695
  %v699 = vmul.f32 %v607, %v696
  %v700 = vmul.f32 %v612, %v697
  %v701 = vld [vmem:[%s2] sm:$0xff]
  %v702 = vld [vmem:[%s2 + $0x8] sm:$0xff]
  %v703 = vld [vmem:[%s2 + $0x10] sm:$0xff]
  %v704 = vld [vmem:[%s2 + $0x18] sm:$0xff]
  %v706 = vsel %vm54, %v698, 0
  %v709 = vsel %vm54, %v699, 0
  %v712 = vsel %vm54, %v700, 0
  %714 = vmatprep.subr.mxu0 0.0
  %715 = vmatpush1.msra.mxu0 %v701
  %716 = vmatprep.subr.mxu0 0.0
  %717 = vmatpush1.msra.mxu0 %v702
  %718 = vmatprep.subr.mxu0 0.0
  %719 = vmatpush1.msra.mxu0 %v703
  %720 = vmatprep.subr.mxu0 0.0
  %721 = vmatpush1.msra.mxu0 %v704
  %722 = vmatprep.subr.mxu0 0.0
  %723 = vmatpush1.msra.mxu0 0.0
  %724 = vmatprep.subr.mxu0 0.0
  %725 = vmatpush1.msra.mxu0 0.0
  %726 = vmatprep.subr.mxu0 0.0
  %727 = vmatpush1.msra.mxu0 0.0
  %728 = vmatprep.subr.mxu0 0.0
  %729 = vmatpush1.msra.mxu0 0.0
  %730 = vmatprep.subr.mxu0 0.0
  %731 = vmatpush1.msra.mxu0 0.0
  %732 = vmatprep.subr.mxu0 0.0
  %733 = vmatpush1.msra.mxu0 0.0
  %734 = vmatprep.subr.mxu0 0.0
  %735 = vmatpush1.msra.mxu0 0.0
  %736 = vmatprep.subr.mxu0 0.0
  %737 = vmatpush1.msra.mxu0 0.0
  %738 = vmatprep.subr.mxu0 0.0
  %739 = vmatpush1.msra.mxu0 0.0
  %740 = vmatprep.subr.mxu0 0.0
  %741 = vmatpush1.msra.mxu0 0.0
  %742 = vmatprep.subr.mxu0 0.0
  %743 = vmatpush1.msra.mxu0 0.0
  %744 = vmatprep.subr.mxu0 0.0
  %745 = vmatpush1.msra.mxu0 0.0
  %746 = vmatprep.subr.mxu0 0.0
  %747 = vmatpush1.msra.mxu0 0.0
  %748 = vmatprep.subr.mxu0 0.0
  %749 = vmatpush1.msra.mxu0 0.0
  %750 = vmatprep.subr.mxu0 0.0
  %751 = vmatpush1.msra.mxu0 0.0
  %752 = vmatprep.subr.mxu0 0.0
  %753 = vmatpush1.msra.mxu0 0.0
  %754 = vmatprep.subr.mxu0 0.0
  %755 = vmatpush1.msra.mxu0 0.0
  %756 = vmatprep.subr.mxu0 0.0
  %757 = vmatpush1.msra.mxu0 0.0
  %758 = vmatprep.subr.mxu0 0.0
  %759 = vmatpush1.msra.mxu0 0.0
  %760 = vmatprep.subr.mxu0 0.0
  %761 = vmatpush1.msra.mxu0 0.0
  %762 = vmatprep.subr.mxu0 0.0
  %763 = vmatpush1.msra.mxu0 0.0
  %764 = vmatprep.subr.mxu0 0.0
  %765 = vmatpush1.msra.mxu0 0.0
  %766 = vmatprep.subr.mxu0 0.0
  %767 = vmatpush1.msra.mxu0 0.0
  %768 = vmatprep.subr.mxu0 0.0
  %769 = vmatpush1.msra.mxu0 0.0
  %770 = vmatprep.subr.mxu0 0.0
  %771 = vmatpush1.msra.mxu0 0.0
  %772 = vmatprep.subr.mxu0 0.0
  %773 = vmatpush1.msra.mxu0 0.0
  %774 = vmatprep.subr.mxu0 0.0
  %775 = vmatpush1.msra.mxu0 0.0
  %776 = vmatprep.subr.mxu0 0.0
  %777 = vmatpush1.msra.mxu0 0.0
  %778 = vmatprep.mubr.f32.mxu0 0.0
  %779 = vmatmul.mubr.f32.gmra.mrb[0].mxu0 %v706
  %v780 = vpop.f32.mrb[0].mxu0
  %v781 = vadd.f32 0.0, %v780
  %v782 = vpop.f32.mrb[0].mxu0
  %783 = vmatprep.mubr.f32.mxu0 0.0
  %784 = vmatmul.mubr.f32.gmra.mrb[0].mxu0 %v709
  %v785 = vpop.f32.mrb[0].mxu0
  %v786 = vadd.f32 0.0, %v785
  %v787 = vpop.f32.mrb[0].mxu0
  %788 = vmatprep.mubr.f32.mxu0 0.0
  %789 = vmatmul.mubr.f32.gmra.mrb[0].mxu0 %v712
  %v790 = vpop.f32.mrb[0].mxu0
  %v791 = vadd.f32 0.0, %v790
  %v792 = vpop.f32.mrb[0].mxu0
  %793 = vdwg.mxu0
  %v794 = vadd.f32 %v35, %v781
  %v795 = vadd.f32 %v36, %v786
  %v796 = vadd.f32 %v37, %v791
  %v797 = vlaneseq
  %v798 = vshrl.u32 %v797, 7
  %v799 = vsub.s32 4, %v798
  %v800 = vrot.slane %v53, %v799
  %v801 = vadd.f32 %v794, %v800
  %v802 = vadd.f32 %v795, %v800
  %v803 = vadd.f32 %v796, %v800
  %v804 = vsel %vm54, %v801, 0.0
  %805 = vadd.xlane.f32.xlu0 %v804
  %v806 = vpop.xlane.xlu0 %805
  %v807 = vsel %vm54, %v802, 0.0
  %808 = vadd.xlane.f32.xlu0 %v807
  %v809 = vpop.xlane.xlu0 %808
  %v810 = vsel %vm54, %v803, 0.0
  %811 = vadd.xlane.f32.xlu0 %v810
  %v812 = vpop.xlane.xlu0 %811
  %v813 = vmul.f32 %v806, %v64
  %v814 = vmul.f32 %v809, %v64
  %v815 = vmul.f32 %v812, %v64
  %v816 = vsub.f32 %v801, %v813
  %v817 = vsub.f32 %v802, %v814
  %v818 = vsub.f32 %v803, %v815
  %v819 = vmul.f32 %v816, %v816
  %v820 = vmul.f32 %v817, %v817
  %v821 = vmul.f32 %v818, %v818
  %v822 = vsel %vm54, %v819, 0.0
  %823 = vadd.xlane.f32.xlu0 %v822
  %v824 = vpop.xlane.xlu0 %823
  %v825 = vsel %vm54, %v820, 0.0
  %826 = vadd.xlane.f32.xlu0 %v825
  %v827 = vpop.xlane.xlu0 %826
  %v828 = vsel %vm54, %v821, 0.0
  %829 = vadd.xlane.f32.xlu0 %v828
  %v830 = vpop.xlane.xlu0 %829
  %v831 = vmul.f32 %v824, %v64
  %v832 = vmul.f32 %v827, %v64
  %v833 = vmul.f32 %v830, %v64
  %v834 = vadd.f32 %v831, 1e-05
  %v835 = vadd.f32 %v832, 1e-05
  %v836 = vadd.f32 %v833, 1e-05
  %v837 = vrsqrt.pop %v834
  %v838 = vrsqrt.pop %v835
  %v839 = vrsqrt.pop %v836
  %v840 = vmul.f32 %v816, %v837
  %v841 = vmul.f32 %v817, %v838
  %v842 = vmul.f32 %v818, %v839
  %v843 = vlaneseq
  %v844 = vshrl.u32 %v843, 7
  %v845 = vsub.s32 2, %v844
  %v846 = vrot.slane %v53, %v845
  %v847 = vmul.f32 %v840, %v846
  %v848 = vmul.f32 %v841, %v846
  %v849 = vmul.f32 %v842, %v846
  %v850 = vlaneseq
  %v851 = vshrl.u32 %v850, 7
  %v852 = vsub.s32 3, %v851
  %v853 = vrot.slane %v53, %v852
  %v854 = vadd.f32 %v847, %v853
  %v855 = vadd.f32 %v848, %v853
  %v856 = vadd.f32 %v849, %v853
  %v857 = vld [vmem:[%s3] sm:$0xff]
  %v858 = vld [vmem:[%s3 + $0x8] sm:$0xff]
  %v859 = vld [vmem:[%s3 + $0x10] sm:$0xff]
  %v860 = vld [vmem:[%s3 + $0x18] sm:$0xff]
  %v861 = vlaneseq
  %v862 = vshrl.u32 %v861, 7
  %v863 = vsub.s32 5, %v862
  %v864 = vrot.slane %v53, %v863
  %v866 = vsel %vm54, %v854, 0
  %v869 = vsel %vm54, %v855, 0
  %v872 = vsel %vm54, %v856, 0
  %874 = vmatprep.subr.mxu0 0.0
  %875 = vmatpush1.msra.mxu0 %v857
  %876 = vmatprep.subr.mxu0 0.0
  %877 = vmatpush1.msra.mxu0 %v858
  %878 = vmatprep.subr.mxu0 0.0
  %879 = vmatpush1.msra.mxu0 %v859
  %880 = vmatprep.subr.mxu0 0.0
  %881 = vmatpush1.msra.mxu0 %v860
  %882 = vmatprep.subr.mxu0 0.0
  %883 = vmatpush1.msra.mxu0 0.0
  %884 = vmatprep.subr.mxu0 0.0
  %885 = vmatpush1.msra.mxu0 0.0
  %886 = vmatprep.subr.mxu0 0.0
  %887 = vmatpush1.msra.mxu0 0.0
  %888 = vmatprep.subr.mxu0 0.0
  %889 = vmatpush1.msra.mxu0 0.0
  %890 = vmatprep.subr.mxu0 0.0
  %891 = vmatpush1.msra.mxu0 0.0
  %892 = vmatprep.subr.mxu0 0.0
  %893 = vmatpush1.msra.mxu0 0.0
  %894 = vmatprep.subr.mxu0 0.0
  %895 = vmatpush1.msra.mxu0 0.0
  %896 = vmatprep.subr.mxu0 0.0
  %897 = vmatpush1.msra.mxu0 0.0
  %898 = vmatprep.subr.mxu0 0.0
  %899 = vmatpush1.msra.mxu0 0.0
  %900 = vmatprep.subr.mxu0 0.0
  %901 = vmatpush1.msra.mxu0 0.0
  %902 = vmatprep.subr.mxu0 0.0
  %903 = vmatpush1.msra.mxu0 0.0
  %904 = vmatprep.subr.mxu0 0.0
  %905 = vmatpush1.msra.mxu0 0.0
  %906 = vmatprep.subr.mxu0 0.0
  %907 = vmatpush1.msra.mxu0 0.0
  %908 = vmatprep.subr.mxu0 0.0
  %909 = vmatpush1.msra.mxu0 0.0
  %910 = vmatprep.subr.mxu0 0.0
  %911 = vmatpush1.msra.mxu0 0.0
  %912 = vmatprep.subr.mxu0 0.0
  %913 = vmatpush1.msra.mxu0 0.0
  %914 = vmatprep.subr.mxu0 0.0
  %915 = vmatpush1.msra.mxu0 0.0
  %916 = vmatprep.subr.mxu0 0.0
  %917 = vmatpush1.msra.mxu0 0.0
  %918 = vmatprep.subr.mxu0 0.0
  %919 = vmatpush1.msra.mxu0 0.0
  %920 = vmatprep.subr.mxu0 0.0
  %921 = vmatpush1.msra.mxu0 0.0
  %922 = vmatprep.subr.mxu0 0.0
  %923 = vmatpush1.msra.mxu0 0.0
  %924 = vmatprep.subr.mxu0 0.0
  %925 = vmatpush1.msra.mxu0 0.0
  %926 = vmatprep.subr.mxu0 0.0
  %927 = vmatpush1.msra.mxu0 0.0
  %928 = vmatprep.subr.mxu0 0.0
  %929 = vmatpush1.msra.mxu0 0.0
  %930 = vmatprep.subr.mxu0 0.0
  %931 = vmatpush1.msra.mxu0 0.0
  %932 = vmatprep.subr.mxu0 0.0
  %933 = vmatpush1.msra.mxu0 0.0
  %934 = vmatprep.subr.mxu0 0.0
  %935 = vmatpush1.msra.mxu0 0.0
  %936 = vmatprep.subr.mxu0 0.0
  %937 = vmatpush1.msra.mxu0 0.0
  %938 = vmatprep.mubr.f32.mxu0 0.0
  %939 = vmatmul.mubr.f32.gmra.mrb[0].mxu0 %v866
  %v940 = vpop.f32.mrb[0].mxu0
  %v941 = vadd.f32 %v864, %v940
  %v942 = vpop.f32.mrb[0].mxu0
  %943 = vmatprep.mubr.f32.mxu0 0.0
  %944 = vmatmul.mubr.f32.gmra.mrb[0].mxu0 %v869
  %v945 = vpop.f32.mrb[0].mxu0
  %v946 = vadd.f32 %v864, %v945
  %v947 = vpop.f32.mrb[0].mxu0
  %948 = vmatprep.mubr.f32.mxu0 0.0
  %949 = vmatmul.mubr.f32.gmra.mrb[0].mxu0 %v872
  %v950 = vpop.f32.mrb[0].mxu0
  %v951 = vadd.f32 %v864, %v950
  %v952 = vpop.f32.mrb[0].mxu0
  %953 = vdwg.mxu0
  %v954 = vmul.f32 %v941, %v941
  %v955 = vmul.f32 %v946, %v946
  %v956 = vmul.f32 %v951, %v951
  %v957 = vmul.f32 %v941, %v954
  %v958 = vmul.f32 %v946, %v955
  %v959 = vmul.f32 %v951, %v956
  %v960 = vmul.f32 %v957, 0.044715
  %v961 = vmul.f32 %v958, 0.044715
  %v962 = vmul.f32 %v959, 0.044715
  %v963 = vadd.f32 %v941, %v960
  %v964 = vadd.f32 %v946, %v961
  %v965 = vadd.f32 %v951, %v962
  %v966 = vmul.f32 %v963, 0.7978846
  %v967 = vmul.f32 %v964, 0.7978846
  %v968 = vmul.f32 %v965, 0.7978846
  %v969 = vtanh.pop %v966
  %v970 = vtanh.pop %v967
  %v971 = vtanh.pop %v968
  %v972 = vadd.f32 %v969, 1.0
  %v973 = vadd.f32 %v970, 1.0
  %v974 = vadd.f32 %v971, 1.0
  %v975 = vmul.f32 %v972, 0.5
  %v976 = vmul.f32 %v973, 0.5
  %v977 = vmul.f32 %v974, 0.5
  %v978 = vmul.f32 %v941, %v975
  %v979 = vmul.f32 %v946, %v976
  %v980 = vmul.f32 %v951, %v977
  %v981 = vld [vmem:[%s4] sm:$0xff]
  %v982 = vld [vmem:[%s4 + $0x8] sm:$0xff]
  %v983 = vld [vmem:[%s4 + $0x10] sm:$0xff]
  %v984 = vld [vmem:[%s4 + $0x18] sm:$0xff]
  %v985 = vld [vmem:[%s4 + $0x20] sm:$0xff]
  %v986 = vld [vmem:[%s4 + $0x28] sm:$0xff]
  %v987 = vld [vmem:[%s4 + $0x30] sm:$0xff]
  %v988 = vld [vmem:[%s4 + $0x38] sm:$0xff]
  %vm989 = vcmask 523264
  %v991 = vsel %vm989, %v978, 0
  %v994 = vsel %vm989, %v979, 0
  %v997 = vsel %vm989, %v980, 0
  %999 = vmatprep.subr.mxu0 0.0
  %1000 = vmatpush1.msra.mxu0 %v981
  %1001 = vmatprep.subr.mxu0 0.0
  %1002 = vmatpush1.msra.mxu0 %v982
  %1003 = vmatprep.subr.mxu0 0.0
  %1004 = vmatpush1.msra.mxu0 %v983
  %1005 = vmatprep.subr.mxu0 0.0
  %1006 = vmatpush1.msra.mxu0 %v984
  %1007 = vmatprep.subr.mxu0 0.0
  %1008 = vmatpush1.msra.mxu0 %v985
  %1009 = vmatprep.subr.mxu0 0.0
  %1010 = vmatpush1.msra.mxu0 %v986
  %1011 = vmatprep.subr.mxu0 0.0
  %1012 = vmatpush1.msra.mxu0 %v987
  %1013 = vmatprep.subr.mxu0 0.0
  %1014 = vmatpush1.msra.mxu0 %v988
  %1015 = vmatprep.subr.mxu0 0.0
  %1016 = vmatpush1.msra.mxu0 0.0
  %1017 = vmatprep.subr.mxu0 0.0
  %1018 = vmatpush1.msra.mxu0 0.0
  %1019 = vmatprep.subr.mxu0 0.0
  %1020 = vmatpush1.msra.mxu0 0.0
  %1021 = vmatprep.subr.mxu0 0.0
  %1022 = vmatpush1.msra.mxu0 0.0
  %1023 = vmatprep.subr.mxu0 0.0
  %1024 = vmatpush1.msra.mxu0 0.0
  %1025 = vmatprep.subr.mxu0 0.0
  %1026 = vmatpush1.msra.mxu0 0.0
  %1027 = vmatprep.subr.mxu0 0.0
  %1028 = vmatpush1.msra.mxu0 0.0
  %1029 = vmatprep.subr.mxu0 0.0
  %1030 = vmatpush1.msra.mxu0 0.0
  %1031 = vmatprep.subr.mxu0 0.0
  %1032 = vmatpush1.msra.mxu0 0.0
  %1033 = vmatprep.subr.mxu0 0.0
  %1034 = vmatpush1.msra.mxu0 0.0
  %1035 = vmatprep.subr.mxu0 0.0
  %1036 = vmatpush1.msra.mxu0 0.0
  %1037 = vmatprep.subr.mxu0 0.0
  %1038 = vmatpush1.msra.mxu0 0.0
  %1039 = vmatprep.subr.mxu0 0.0
  %1040 = vmatpush1.msra.mxu0 0.0
  %1041 = vmatprep.subr.mxu0 0.0
  %1042 = vmatpush1.msra.mxu0 0.0
  %1043 = vmatprep.subr.mxu0 0.0
  %1044 = vmatpush1.msra.mxu0 0.0
  %1045 = vmatprep.subr.mxu0 0.0
  %1046 = vmatpush1.msra.mxu0 0.0
  %1047 = vmatprep.subr.mxu0 0.0
  %1048 = vmatpush1.msra.mxu0 0.0
  %1049 = vmatprep.subr.mxu0 0.0
  %1050 = vmatpush1.msra.mxu0 0.0
  %1051 = vmatprep.subr.mxu0 0.0
  %1052 = vmatpush1.msra.mxu0 0.0
  %1053 = vmatprep.subr.mxu0 0.0
  %1054 = vmatpush1.msra.mxu0 0.0
  %1055 = vmatprep.subr.mxu0 0.0
  %1056 = vmatpush1.msra.mxu0 0.0
  %1057 = vmatprep.subr.mxu0 0.0
  %1058 = vmatpush1.msra.mxu0 0.0
  %1059 = vmatprep.subr.mxu0 0.0
  %1060 = vmatpush1.msra.mxu0 0.0
  %1061 = vmatprep.subr.mxu0 0.0
  %1062 = vmatpush1.msra.mxu0 0.0
  %1063 = vmatprep.mubr.f32.mxu0 0.0
  %1064 = vmatmul.mubr.f32.gmra.mrb[0].mxu0 %v991
  %v1065 = vpop.f32.mrb[0].mxu0
  %v1066 = vadd.f32 0.0, %v1065
  %v1067 = vpop.f32.mrb[0].mxu0
  %1068 = vmatprep.mubr.f32.mxu0 0.0
  %1069 = vmatmul.mubr.f32.gmra.mrb[0].mxu0 %v994
  %v1070 = vpop.f32.mrb[0].mxu0
  %v1071 = vadd.f32 0.0, %v1070
  %v1072 = vpop.f32.mrb[0].mxu0
  %1073 = vmatprep.mubr.f32.mxu0 0.0
  %1074 = vmatmul.mubr.f32.gmra.mrb[0].mxu0 %v997
  %v1075 = vpop.f32.mrb[0].mxu0
  %v1076 = vadd.f32 0.0, %v1075
  %v1077 = vpop.f32.mrb[0].mxu0
  %1078 = vdwg.mxu0
  %v1079 = vadd.f32 %v801, %v1066
  %v1080 = vadd.f32 %v802, %v1071
  %v1081 = vadd.f32 %v803, %v1076
  %v1082 = vlaneseq
  %v1083 = vshrl.u32 %v1082, 7
  %v1084 = vsub.s32 6, %v1083
  %v1085 = vrot.slane %v53, %v1084
  %v1086 = vadd.f32 %v1079, %v1085
  %v1087 = vadd.f32 %v1080, %v1085
  %v1088 = vadd.f32 %v1081, %v1085
  %s1089 = scalar_lea.vmem %s5, 8
  %v1090 = vld [vmem:[%s1089] sm:$0xff]
  %v1091 = vsel %vm54, %v1086, 0.0
  %1092 = vadd.xlane.f32.xlu0 %v1091
  %v1093 = vpop.xlane.xlu0 %1092
  %v1094 = vsel %vm54, %v1087, 0.0
  %1095 = vadd.xlane.f32.xlu0 %v1094
  %v1096 = vpop.xlane.xlu0 %1095
  %v1097 = vsel %vm54, %v1088, 0.0
  %1098 = vadd.xlane.f32.xlu0 %v1097
  %v1099 = vpop.xlane.xlu0 %1098
  %v1100 = vmul.f32 %v1093, %v64
  %v1101 = vmul.f32 %v1096, %v64
  %v1102 = vmul.f32 %v1099, %v64
  %v1103 = vsub.f32 %v1086, %v1100
  %v1104 = vsub.f32 %v1087, %v1101
  %v1105 = vsub.f32 %v1088, %v1102
  %v1106 = vmul.f32 %v1103, %v1103
  %v1107 = vmul.f32 %v1104, %v1104
  %v1108 = vmul.f32 %v1105, %v1105
  %v1109 = vsel %vm54, %v1106, 0.0
  %1110 = vadd.xlane.f32.xlu0 %v1109
  %v1111 = vpop.xlane.xlu0 %1110
  %v1112 = vsel %vm54, %v1107, 0.0
  %1113 = vadd.xlane.f32.xlu0 %v1112
  %v1114 = vpop.xlane.xlu0 %1113
  %v1115 = vsel %vm54, %v1108, 0.0
  %1116 = vadd.xlane.f32.xlu0 %v1115
  %v1117 = vpop.xlane.xlu0 %1116
  %v1118 = vmul.f32 %v1111, %v64
  %v1119 = vmul.f32 %v1114, %v64
  %v1120 = vmul.f32 %v1117, %v64
  %v1121 = vadd.f32 %v1118, 1e-05
  %v1122 = vadd.f32 %v1119, 1e-05
  %v1123 = vadd.f32 %v1120, 1e-05
  %v1124 = vrsqrt.pop %v1121
  %v1125 = vrsqrt.pop %v1122
  %v1126 = vrsqrt.pop %v1123
  %v1127 = vmul.f32 %v1103, %v1124
  %v1128 = vmul.f32 %v1104, %v1125
  %v1129 = vmul.f32 %v1105, %v1126
  %v1130 = vlaneseq
  %v1131 = vshrl.u32 %v1130, 7
  %v1132 = vsub.s32 0, %v1131
  %v1133 = vrot.slane %v1090, %v1132
  %v1134 = vmul.f32 %v1127, %v1133
  %v1135 = vmul.f32 %v1128, %v1133
  %v1136 = vmul.f32 %v1129, %v1133
  %v1137 = vlaneseq
  %v1138 = vshrl.u32 %v1137, 7
  %v1139 = vsub.s32 1, %v1138
  %v1140 = vrot.slane %v1090, %v1139
  %v1141 = vadd.f32 %v1134, %v1140
  %v1142 = vadd.f32 %v1135, %v1140
  %v1143 = vadd.f32 %v1136, %v1140
  %s1144 = scalar_lea.vmem %s1, 32
  %v1145 = vld [vmem:[%s1144] sm:$0xff]
  %v1146 = vld [vmem:[%s1144 + $0x8] sm:$0xff]
  %v1147 = vld [vmem:[%s1144 + $0x10] sm:$0xff]
  %v1148 = vld [vmem:[%s1144 + $0x18] sm:$0xff]
  %v1150 = vsel %vm54, %v1141, 0
  %v1153 = vsel %vm54, %v1142, 0
  %v1156 = vsel %vm54, %v1143, 0
  %1158 = vmatprep.subr.mxu0 0.0
  %1159 = vmatpush1.msra.mxu0 %v1145
  %1160 = vmatprep.subr.mxu0 0.0
  %1161 = vmatpush1.msra.mxu0 %v1146
  %1162 = vmatprep.subr.mxu0 0.0
  %1163 = vmatpush1.msra.mxu0 %v1147
  %1164 = vmatprep.subr.mxu0 0.0
  %1165 = vmatpush1.msra.mxu0 %v1148
  %1166 = vmatprep.subr.mxu0 0.0
  %1167 = vmatpush1.msra.mxu0 0.0
  %1168 = vmatprep.subr.mxu0 0.0
  %1169 = vmatpush1.msra.mxu0 0.0
  %1170 = vmatprep.subr.mxu0 0.0
  %1171 = vmatpush1.msra.mxu0 0.0
  %1172 = vmatprep.subr.mxu0 0.0
  %1173 = vmatpush1.msra.mxu0 0.0
  %1174 = vmatprep.subr.mxu0 0.0
  %1175 = vmatpush1.msra.mxu0 0.0
  %1176 = vmatprep.subr.mxu0 0.0
  %1177 = vmatpush1.msra.mxu0 0.0
  %1178 = vmatprep.subr.mxu0 0.0
  %1179 = vmatpush1.msra.mxu0 0.0
  %1180 = vmatprep.subr.mxu0 0.0
  %1181 = vmatpush1.msra.mxu0 0.0
  %1182 = vmatprep.subr.mxu0 0.0
  %1183 = vmatpush1.msra.mxu0 0.0
  %1184 = vmatprep.subr.mxu0 0.0
  %1185 = vmatpush1.msra.mxu0 0.0
  %1186 = vmatprep.subr.mxu0 0.0
  %1187 = vmatpush1.msra.mxu0 0.0
  %1188 = vmatprep.subr.mxu0 0.0
  %1189 = vmatpush1.msra.mxu0 0.0
  %1190 = vmatprep.subr.mxu0 0.0
  %1191 = vmatpush1.msra.mxu0 0.0
  %1192 = vmatprep.subr.mxu0 0.0
  %1193 = vmatpush1.msra.mxu0 0.0
  %1194 = vmatprep.subr.mxu0 0.0
  %1195 = vmatpush1.msra.mxu0 0.0
  %1196 = vmatprep.subr.mxu0 0.0
  %1197 = vmatpush1.msra.mxu0 0.0
  %1198 = vmatprep.subr.mxu0 0.0
  %1199 = vmatpush1.msra.mxu0 0.0
  %1200 = vmatprep.subr.mxu0 0.0
  %1201 = vmatpush1.msra.mxu0 0.0
  %1202 = vmatprep.subr.mxu0 0.0
  %1203 = vmatpush1.msra.mxu0 0.0
  %1204 = vmatprep.subr.mxu0 0.0
  %1205 = vmatpush1.msra.mxu0 0.0
  %1206 = vmatprep.subr.mxu0 0.0
  %1207 = vmatpush1.msra.mxu0 0.0
  %1208 = vmatprep.subr.mxu0 0.0
  %1209 = vmatpush1.msra.mxu0 0.0
  %1210 = vmatprep.subr.mxu0 0.0
  %1211 = vmatpush1.msra.mxu0 0.0
  %1212 = vmatprep.subr.mxu0 0.0
  %1213 = vmatpush1.msra.mxu0 0.0
  %1214 = vmatprep.subr.mxu0 0.0
  %1215 = vmatpush1.msra.mxu0 0.0
  %1216 = vmatprep.subr.mxu0 0.0
  %1217 = vmatpush1.msra.mxu0 0.0
  %1218 = vmatprep.subr.mxu0 0.0
  %1219 = vmatpush1.msra.mxu0 0.0
  %1220 = vmatprep.subr.mxu0 0.0
  %1221 = vmatpush1.msra.mxu0 0.0
  %1222 = vmatprep.mubr.f32.mxu0 0.0
  %1223 = vmatmul.mubr.f32.gmra.mrb[0].mxu0 %v1150
  %v1224 = vpop.f32.mrb[0].mxu0
  %v1225 = vadd.f32 0.0, %v1224
  %v1226 = vpop.f32.mrb[0].mxu0
  %1227 = vmatprep.mubr.f32.mxu0 0.0
  %1228 = vmatmul.mubr.f32.gmra.mrb[0].mxu0 %v1153
  %v1229 = vpop.f32.mrb[0].mxu0
  %v1230 = vadd.f32 0.0, %v1229
  %v1231 = vpop.f32.mrb[0].mxu0
  %1232 = vmatprep.mubr.f32.mxu0 0.0
  %1233 = vmatmul.mubr.f32.gmra.mrb[0].mxu0 %v1156
  %v1234 = vpop.f32.mrb[0].mxu0
  %v1235 = vadd.f32 0.0, %v1234
  %v1236 = vpop.f32.mrb[0].mxu0
  %1237 = vdwg.mxu0
  %v1238 = vmul.f32 %v1225, %v215
  %v1239 = vmul.f32 %v1230, %v217
  %v1240 = vmul.f32 %v1235, %v219
  %v1241 = vmul.f32 %v1225, %v221
  %v1242 = vmul.f32 %v1230, %v223
  %v1243 = vmul.f32 %v1235, %v225
  %v1244 = vmul.f32 %v1225, %v227
  %v1245 = vmul.f32 %v1230, %v229
  %v1246 = vmul.f32 %v1235, %v231
  %v1247 = vmul.f32 %v1225, %v233
  %v1248 = vmul.f32 %v1230, %v235
  %v1249 = vmul.f32 %v1235, %v237
  %v1250 = vmul.f32 %v1225, %v263
  %v1251 = vmul.f32 %v1230, %v265
  %v1252 = vmul.f32 %v1235, %v267
  %v1253 = vmul.f32 %v1225, %v269
  %v1254 = vmul.f32 %v1230, %v271
  %v1255 = vmul.f32 %v1235, %v273
  %v1256 = vmul.f32 %v1225, %v275
  %v1257 = vmul.f32 %v1230, %v277
  %v1258 = vmul.f32 %v1235, %v279
  %v1259 = vmul.f32 %v1225, %v281
  %v1260 = vmul.f32 %v1230, %v283
  %v1261 = vmul.f32 %v1235, %v285
  %1274 = vrot.lane.b32.xlu0 %v1238, 96
  %v1275 = vpop.permute.xlu0 %1274
  %1276 = vrot.lane.b32.xlu0 %v1239, 96
  %v1277 = vpop.permute.xlu0 %1276
  %1278 = vrot.lane.b32.xlu0 %v1240, 96
  %v1279 = vpop.permute.xlu0 %1278
  %1280 = vrot.lane.b32.xlu0 %v1241, 96
  %v1281 = vpop.permute.xlu0 %1280
  %1282 = vrot.lane.b32.xlu0 %v1242, 96
  %v1283 = vpop.permute.xlu0 %1282
  %1284 = vrot.lane.b32.xlu0 %v1243, 96
  %v1285 = vpop.permute.xlu0 %1284
  %1286 = vrot.lane.b32.xlu0 %v1244, 96
  %v1287 = vpop.permute.xlu0 %1286
  %1288 = vrot.lane.b32.xlu0 %v1245, 96
  %v1289 = vpop.permute.xlu0 %1288
  %1290 = vrot.lane.b32.xlu0 %v1246, 96
  %v1291 = vpop.permute.xlu0 %1290
  %1292 = vrot.lane.b32.xlu0 %v1247, 96
  %v1293 = vpop.permute.xlu0 %1292
  %1294 = vrot.lane.b32.xlu0 %v1248, 96
  %v1295 = vpop.permute.xlu0 %1294
  %1296 = vrot.lane.b32.xlu0 %v1249, 96
  %v1297 = vpop.permute.xlu0 %1296
  %v1299 = vsel %vm54, %v1225, 0
  %v1302 = vsel %vm54, %v1230, 0
  %v1305 = vsel %vm54, %v1235, 0
  %v1307 = vsel %vm54, %v1275, 0
  %v1309 = vsel %vm54, %v1277, 0
  %v1311 = vsel %vm54, %v1279, 0
  %v1313 = vsel %vm54, %v1281, 0
  %v1315 = vsel %vm54, %v1283, 0
  %v1317 = vsel %vm54, %v1285, 0
  %v1319 = vsel %vm54, %v1287, 0
  %v1321 = vsel %vm54, %v1289, 0
  %v1323 = vsel %vm54, %v1291, 0
  %v1325 = vsel %vm54, %v1293, 0
  %v1327 = vsel %vm54, %v1295, 0
  %v1329 = vsel %vm54, %v1297, 0
  %1331 = vmatprep.subr.mxu0 0.0
  %1332 = vmatpush1.xpose.msra.mxu0 %v1307
  %1333 = vmatprep.subr.mxu0 0.0
  %1334 = vmatpush1.xpose.msra.mxu0 %v1309
  %1335 = vmatprep.subr.mxu0 0.0
  %1336 = vmatpush1.xpose.msra.mxu0 %v1311
  %1337 = vmatprep.subr.mxu0 0.0
  %1338 = vmatpush1.xpose.msra.mxu0 %v1313
  %1339 = vmatprep.subr.mxu0 0.0
  %1340 = vmatpush1.xpose.msra.mxu0 %v1315
  %1341 = vmatprep.subr.mxu0 0.0
  %1342 = vmatpush1.xpose.msra.mxu0 %v1317
  %1343 = vmatprep.subr.mxu0 0.0
  %1344 = vmatpush1.xpose.msra.mxu0 %v1319
  %1345 = vmatprep.subr.mxu0 0.0
  %1346 = vmatpush1.xpose.msra.mxu0 %v1321
  %1347 = vmatprep.subr.mxu0 0.0
  %1348 = vmatpush1.xpose.msra.mxu0 %v1323
  %1349 = vmatprep.subr.mxu0 0.0
  %1350 = vmatpush1.xpose.msra.mxu0 %v1325
  %1351 = vmatprep.subr.mxu0 0.0
  %1352 = vmatpush1.xpose.msra.mxu0 %v1327
  %1353 = vmatprep.subr.mxu0 0.0
  %1354 = vmatpush1.xpose.msra.mxu0 %v1329
  %1355 = vmatprep.subr.mxu0 0.0
  %1356 = vmatpush1.xpose.msra.mxu0 0.0
  %1357 = vmatprep.subr.mxu0 0.0
  %1358 = vmatpush1.xpose.msra.mxu0 0.0
  %1359 = vmatprep.subr.mxu0 0.0
  %1360 = vmatpush1.xpose.msra.mxu0 0.0
  %1361 = vmatprep.subr.mxu0 0.0
  %1362 = vmatpush1.xpose.msra.mxu0 0.0
  %1363 = vmatprep.subr.mxu0 0.0
  %1364 = vmatpush1.xpose.msra.mxu0 0.0
  %1365 = vmatprep.subr.mxu0 0.0
  %1366 = vmatpush1.xpose.msra.mxu0 0.0
  %1367 = vmatprep.subr.mxu0 0.0
  %1368 = vmatpush1.xpose.msra.mxu0 0.0
  %1369 = vmatprep.subr.mxu0 0.0
  %1370 = vmatpush1.xpose.msra.mxu0 0.0
  %1371 = vmatprep.subr.mxu0 0.0
  %1372 = vmatpush1.xpose.msra.mxu0 0.0
  %1373 = vmatprep.subr.mxu0 0.0
  %1374 = vmatpush1.xpose.msra.mxu0 0.0
  %1375 = vmatprep.subr.mxu0 0.0
  %1376 = vmatpush1.xpose.msra.mxu0 0.0
  %1377 = vmatprep.subr.mxu0 0.0
  %1378 = vmatpush1.xpose.msra.mxu0 0.0
  %1379 = vmatprep.subr.mxu0 0.0
  %1380 = vmatpush1.xpose.msra.mxu0 0.0
  %1381 = vmatprep.subr.mxu0 0.0
  %1382 = vmatpush1.xpose.msra.mxu0 0.0
  %1383 = vmatprep.subr.mxu0 0.0
  %1384 = vmatpush1.xpose.msra.mxu0 0.0
  %1385 = vmatprep.subr.mxu0 0.0
  %1386 = vmatpush1.xpose.msra.mxu0 0.0
  %1387 = vmatprep.subr.mxu0 0.0
  %1388 = vmatpush1.xpose.msra.mxu0 0.0
  %1389 = vmatprep.subr.mxu0 0.0
  %1390 = vmatpush1.xpose.msra.mxu0 0.0
  %1391 = vmatprep.subr.mxu0 0.0
  %1392 = vmatpush1.xpose.msra.mxu0 0.0
  %1393 = vmatprep.subr.mxu0 0.0
  %1394 = vmatpush1.xpose.msra.mxu0 0.0
  %1395 = vmatprep.mubr.f32.mxu0 0.0
  %1396 = vmatmul.mubr.f32.gmra.mrb[0].mxu0 %v1299
  %v1397 = vpop.f32.mrb[0].mxu0
  %v1398 = vadd.f32 %v50, %v1397
  %v1399 = vpop.f32.mrb[0].mxu0
  %1400 = vmatprep.mubr.f32.mxu0 0.0
  %1401 = vmatmul.mubr.f32.gmra.mrb[0].mxu0 %v1302
  %v1402 = vpop.f32.mrb[0].mxu0
  %v1403 = vadd.f32 %v51, %v1402
  %v1404 = vpop.f32.mrb[0].mxu0
  %1405 = vmatprep.mubr.f32.mxu0 0.0
  %1406 = vmatmul.mubr.f32.gmra.mrb[0].mxu0 %v1305
  %v1407 = vpop.f32.mrb[0].mxu0
  %v1408 = vadd.f32 %v52, %v1407
  %v1409 = vpop.f32.mrb[0].mxu0
  %1410 = vdwg.mxu0
  %v1411 = vsel %vm459, %v1398, -inf
  %1412 = vmax.xlane.f32.xlu0 %v1411
  %v1413 = vpop.xlane.xlu0 %1412
  %v1414 = vsel %vm459, %v1403, -inf
  %1415 = vmax.xlane.f32.xlu0 %v1414
  %v1416 = vpop.xlane.xlu0 %1415
  %v1417 = vsel %vm459, %v1408, -inf
  %1418 = vmax.xlane.f32.xlu0 %v1417
  %v1419 = vpop.xlane.xlu0 %1418
  %v1420 = vsub.f32 %v1398, %v1413
  %v1421 = vsub.f32 %v1403, %v1416
  %v1422 = vsub.f32 %v1408, %v1419
  %v1423 = vmul.f32 %v1420, 1.442695
  %v1424 = vpow.pop %v1423
  %v1425 = vmul.f32 %v1421, 1.442695
  %v1426 = vpow.pop %v1425
  %v1427 = vmul.f32 %v1422, 1.442695
  %v1428 = vpow.pop %v1427
  %1441 = vrot.lane.b32.xlu0 %v1250, 64
  %v1442 = vpop.permute.xlu0 %1441
  %1443 = vrot.lane.b32.xlu0 %v1251, 64
  %v1444 = vpop.permute.xlu0 %1443
  %1445 = vrot.lane.b32.xlu0 %v1252, 64
  %v1446 = vpop.permute.xlu0 %1445
  %1447 = vrot.lane.b32.xlu0 %v1253, 64
  %v1448 = vpop.permute.xlu0 %1447
  %1449 = vrot.lane.b32.xlu0 %v1254, 64
  %v1450 = vpop.permute.xlu0 %1449
  %1451 = vrot.lane.b32.xlu0 %v1255, 64
  %v1452 = vpop.permute.xlu0 %1451
  %1453 = vrot.lane.b32.xlu0 %v1256, 64
  %v1454 = vpop.permute.xlu0 %1453
  %1455 = vrot.lane.b32.xlu0 %v1257, 64
  %v1456 = vpop.permute.xlu0 %1455
  %1457 = vrot.lane.b32.xlu0 %v1258, 64
  %v1458 = vpop.permute.xlu0 %1457
  %1459 = vrot.lane.b32.xlu0 %v1259, 64
  %v1460 = vpop.permute.xlu0 %1459
  %1461 = vrot.lane.b32.xlu0 %v1260, 64
  %v1462 = vpop.permute.xlu0 %1461
  %1463 = vrot.lane.b32.xlu0 %v1261, 64
  %v1464 = vpop.permute.xlu0 %1463
  %v1478 = vsel %vm459, %v1424, 0
  %v1481 = vsel %vm459, %v1426, 0
  %v1484 = vsel %vm459, %v1428, 0
  %1486 = vmatprep.subr.mxu0 0.0
  %1487 = vmatpush1.msra.mxu0 %v1442
  %1488 = vmatprep.subr.mxu0 0.0
  %1489 = vmatpush1.msra.mxu0 %v1444
  %1490 = vmatprep.subr.mxu0 0.0
  %1491 = vmatpush1.msra.mxu0 %v1446
  %1492 = vmatprep.subr.mxu0 0.0
  %1493 = vmatpush1.msra.mxu0 %v1448
  %1494 = vmatprep.subr.mxu0 0.0
  %1495 = vmatpush1.msra.mxu0 %v1450
  %1496 = vmatprep.subr.mxu0 0.0
  %1497 = vmatpush1.msra.mxu0 %v1452
  %1498 = vmatprep.subr.mxu0 0.0
  %1499 = vmatpush1.msra.mxu0 %v1454
  %1500 = vmatprep.subr.mxu0 0.0
  %1501 = vmatpush1.msra.mxu0 %v1456
  %1502 = vmatprep.subr.mxu0 0.0
  %1503 = vmatpush1.msra.mxu0 %v1458
  %1504 = vmatprep.subr.mxu0 0.0
  %1505 = vmatpush1.msra.mxu0 %v1460
  %1506 = vmatprep.subr.mxu0 0.0
  %1507 = vmatpush1.msra.mxu0 %v1462
  %1508 = vmatprep.subr.mxu0 0.0
  %1509 = vmatpush1.msra.mxu0 %v1464
  %1510 = vmatprep.subr.mxu0 0.0
  %1511 = vmatpush1.msra.mxu0 0.0
  %1512 = vmatprep.subr.mxu0 0.0
  %1513 = vmatpush1.msra.mxu0 0.0
  %1514 = vmatprep.subr.mxu0 0.0
  %1515 = vmatpush1.msra.mxu0 0.0
  %1516 = vmatprep.subr.mxu0 0.0
  %1517 = vmatpush1.msra.mxu0 0.0
  %1518 = vmatprep.subr.mxu0 0.0
  %1519 = vmatpush1.msra.mxu0 0.0
  %1520 = vmatprep.subr.mxu0 0.0
  %1521 = vmatpush1.msra.mxu0 0.0
  %1522 = vmatprep.subr.mxu0 0.0
  %1523 = vmatpush1.msra.mxu0 0.0
  %1524 = vmatprep.subr.mxu0 0.0
  %1525 = vmatpush1.msra.mxu0 0.0
  %1526 = vmatprep.subr.mxu0 0.0
  %1527 = vmatpush1.msra.mxu0 0.0
  %1528 = vmatprep.subr.mxu0 0.0
  %1529 = vmatpush1.msra.mxu0 0.0
  %1530 = vmatprep.subr.mxu0 0.0
  %1531 = vmatpush1.msra.mxu0 0.0
  %1532 = vmatprep.subr.mxu0 0.0
  %1533 = vmatpush1.msra.mxu0 0.0
  %1534 = vmatprep.subr.mxu0 0.0
  %1535 = vmatpush1.msra.mxu0 0.0
  %1536 = vmatprep.subr.mxu0 0.0
  %1537 = vmatpush1.msra.mxu0 0.0
  %1538 = vmatprep.subr.mxu0 0.0
  %1539 = vmatpush1.msra.mxu0 0.0
  %1540 = vmatprep.subr.mxu0 0.0
  %1541 = vmatpush1.msra.mxu0 0.0
  %1542 = vmatprep.subr.mxu0 0.0
  %1543 = vmatpush1.msra.mxu0 0.0
  %1544 = vmatprep.subr.mxu0 0.0
  %1545 = vmatpush1.msra.mxu0 0.0
  %1546 = vmatprep.subr.mxu0 0.0
  %1547 = vmatpush1.msra.mxu0 0.0
  %1548 = vmatprep.subr.mxu0 0.0
  %1549 = vmatpush1.msra.mxu0 0.0
  %1550 = vmatprep.mubr.f32.mxu0 0.0
  %1551 = vmatmul.mubr.f32.gmra.mrb[0].mxu0 %v1478
  %v1552 = vpop.f32.mrb[0].mxu0
  %v1553 = vadd.f32 0.0, %v1552
  %v1554 = vpop.f32.mrb[0].mxu0
  %1555 = vmatprep.mubr.f32.mxu0 0.0
  %1556 = vmatmul.mubr.f32.gmra.mrb[0].mxu0 %v1481
  %v1557 = vpop.f32.mrb[0].mxu0
  %v1558 = vadd.f32 0.0, %v1557
  %v1559 = vpop.f32.mrb[0].mxu0
  %1560 = vmatprep.mubr.f32.mxu0 0.0
  %1561 = vmatmul.mubr.f32.gmra.mrb[0].mxu0 %v1484
  %v1562 = vpop.f32.mrb[0].mxu0
  %v1563 = vadd.f32 0.0, %v1562
  %v1564 = vpop.f32.mrb[0].mxu0
  %1565 = vdwg.mxu0
  %1566 = vmatprep.subr.mxu0 0.0
  %1567 = vmatpush1.msra.mxu0 %v38
  %1568 = vmatprep.subr.mxu0 0.0
  %1569 = vmatpush1.msra.mxu0 %v39
  %1570 = vmatprep.subr.mxu0 0.0
  %1571 = vmatpush1.msra.mxu0 %v40
  %1572 = vmatprep.subr.mxu0 0.0
  %1573 = vmatpush1.msra.mxu0 %v41
  %1574 = vmatprep.subr.mxu0 0.0
  %1575 = vmatpush1.msra.mxu0 %v42
  %1576 = vmatprep.subr.mxu0 0.0
  %1577 = vmatpush1.msra.mxu0 %v43
  %1578 = vmatprep.subr.mxu0 0.0
  %1579 = vmatpush1.msra.mxu0 %v44
  %1580 = vmatprep.subr.mxu0 0.0
  %1581 = vmatpush1.msra.mxu0 %v45
  %1582 = vmatprep.subr.mxu0 0.0
  %1583 = vmatpush1.msra.mxu0 %v46
  %1584 = vmatprep.subr.mxu0 0.0
  %1585 = vmatpush1.msra.mxu0 %v47
  %1586 = vmatprep.subr.mxu0 0.0
  %1587 = vmatpush1.msra.mxu0 %v48
  %1588 = vmatprep.subr.mxu0 0.0
  %1589 = vmatpush1.msra.mxu0 %v49
  %1590 = vmatprep.subr.mxu0 0.0
  %1591 = vmatpush1.msra.mxu0 0.0
  %1592 = vmatprep.subr.mxu0 0.0
  %1593 = vmatpush1.msra.mxu0 0.0
  %1594 = vmatprep.subr.mxu0 0.0
  %1595 = vmatpush1.msra.mxu0 0.0
  %1596 = vmatprep.subr.mxu0 0.0
  %1597 = vmatpush1.msra.mxu0 0.0
  %1598 = vmatprep.subr.mxu0 0.0
  %1599 = vmatpush1.msra.mxu0 0.0
  %1600 = vmatprep.subr.mxu0 0.0
  %1601 = vmatpush1.msra.mxu0 0.0
  %1602 = vmatprep.subr.mxu0 0.0
  %1603 = vmatpush1.msra.mxu0 0.0
  %1604 = vmatprep.subr.mxu0 0.0
  %1605 = vmatpush1.msra.mxu0 0.0
  %1606 = vmatprep.subr.mxu0 0.0
  %1607 = vmatpush1.msra.mxu0 0.0
  %1608 = vmatprep.subr.mxu0 0.0
  %1609 = vmatpush1.msra.mxu0 0.0
  %1610 = vmatprep.subr.mxu0 0.0
  %1611 = vmatpush1.msra.mxu0 0.0
  %1612 = vmatprep.subr.mxu0 0.0
  %1613 = vmatpush1.msra.mxu0 0.0
  %1614 = vmatprep.subr.mxu0 0.0
  %1615 = vmatpush1.msra.mxu0 0.0
  %1616 = vmatprep.subr.mxu0 0.0
  %1617 = vmatpush1.msra.mxu0 0.0
  %1618 = vmatprep.subr.mxu0 0.0
  %1619 = vmatpush1.msra.mxu0 0.0
  %1620 = vmatprep.subr.mxu0 0.0
  %1621 = vmatpush1.msra.mxu0 0.0
  %1622 = vmatprep.subr.mxu0 0.0
  %1623 = vmatpush1.msra.mxu0 0.0
  %1624 = vmatprep.subr.mxu0 0.0
  %1625 = vmatpush1.msra.mxu0 0.0
  %1626 = vmatprep.subr.mxu0 0.0
  %1627 = vmatpush1.msra.mxu0 0.0
  %1628 = vmatprep.subr.mxu0 0.0
  %1629 = vmatpush1.msra.mxu0 0.0
  %1630 = vmatprep.mubr.f32.mxu0 0.0
  %1631 = vmatmul.mubr.f32.gmra.mrb[0].mxu0 %v1478
  %v1632 = vpop.f32.mrb[0].mxu0
  %v1633 = vadd.f32 0.0, %v1632
  %v1634 = vpop.f32.mrb[0].mxu0
  %1635 = vmatprep.mubr.f32.mxu0 0.0
  %1636 = vmatmul.mubr.f32.gmra.mrb[0].mxu0 %v1481
  %v1637 = vpop.f32.mrb[0].mxu0
  %v1638 = vadd.f32 0.0, %v1637
  %v1639 = vpop.f32.mrb[0].mxu0
  %1640 = vmatprep.mubr.f32.mxu0 0.0
  %1641 = vmatmul.mubr.f32.gmra.mrb[0].mxu0 %v1484
  %v1642 = vpop.f32.mrb[0].mxu0
  %v1643 = vadd.f32 0.0, %v1642
  %v1644 = vpop.f32.mrb[0].mxu0
  %1645 = vdwg.mxu0
  %v1646 = vrcp.pop %v1633
  %v1647 = vrcp.pop %v1638
  %v1648 = vrcp.pop %v1643
  %v1649 = vmul.f32 %v1553, %v1646
  %v1650 = vmul.f32 %v1558, %v1647
  %v1651 = vmul.f32 %v1563, %v1648
  %s1652 = scalar_lea.vmem %s2, 32
  %v1653 = vld [vmem:[%s1652] sm:$0xff]
  %v1654 = vld [vmem:[%s1652 + $0x8] sm:$0xff]
  %v1655 = vld [vmem:[%s1652 + $0x10] sm:$0xff]
  %v1656 = vld [vmem:[%s1652 + $0x18] sm:$0xff]
  %v1658 = vsel %vm54, %v1649, 0
  %v1661 = vsel %vm54, %v1650, 0
  %v1664 = vsel %vm54, %v1651, 0
  %1666 = vmatprep.subr.mxu0 0.0
  %1667 = vmatpush1.msra.mxu0 %v1653
  %1668 = vmatprep.subr.mxu0 0.0
  %1669 = vmatpush1.msra.mxu0 %v1654
  %1670 = vmatprep.subr.mxu0 0.0
  %1671 = vmatpush1.msra.mxu0 %v1655
  %1672 = vmatprep.subr.mxu0 0.0
  %1673 = vmatpush1.msra.mxu0 %v1656
  %1674 = vmatprep.subr.mxu0 0.0
  %1675 = vmatpush1.msra.mxu0 0.0
  %1676 = vmatprep.subr.mxu0 0.0
  %1677 = vmatpush1.msra.mxu0 0.0
  %1678 = vmatprep.subr.mxu0 0.0
  %1679 = vmatpush1.msra.mxu0 0.0
  %1680 = vmatprep.subr.mxu0 0.0
  %1681 = vmatpush1.msra.mxu0 0.0
  %1682 = vmatprep.subr.mxu0 0.0
  %1683 = vmatpush1.msra.mxu0 0.0
  %1684 = vmatprep.subr.mxu0 0.0
  %1685 = vmatpush1.msra.mxu0 0.0
  %1686 = vmatprep.subr.mxu0 0.0
  %1687 = vmatpush1.msra.mxu0 0.0
  %1688 = vmatprep.subr.mxu0 0.0
  %1689 = vmatpush1.msra.mxu0 0.0
  %1690 = vmatprep.subr.mxu0 0.0
  %1691 = vmatpush1.msra.mxu0 0.0
  %1692 = vmatprep.subr.mxu0 0.0
  %1693 = vmatpush1.msra.mxu0 0.0
  %1694 = vmatprep.subr.mxu0 0.0
  %1695 = vmatpush1.msra.mxu0 0.0
  %1696 = vmatprep.subr.mxu0 0.0
  %1697 = vmatpush1.msra.mxu0 0.0
  %1698 = vmatprep.subr.mxu0 0.0
  %1699 = vmatpush1.msra.mxu0 0.0
  %1700 = vmatprep.subr.mxu0 0.0
  %1701 = vmatpush1.msra.mxu0 0.0
  %1702 = vmatprep.subr.mxu0 0.0
  %1703 = vmatpush1.msra.mxu0 0.0
  %1704 = vmatprep.subr.mxu0 0.0
  %1705 = vmatpush1.msra.mxu0 0.0
  %1706 = vmatprep.subr.mxu0 0.0
  %1707 = vmatpush1.msra.mxu0 0.0
  %1708 = vmatprep.subr.mxu0 0.0
  %1709 = vmatpush1.msra.mxu0 0.0
  %1710 = vmatprep.subr.mxu0 0.0
  %1711 = vmatpush1.msra.mxu0 0.0
  %1712 = vmatprep.subr.mxu0 0.0
  %1713 = vmatpush1.msra.mxu0 0.0
  %1714 = vmatprep.subr.mxu0 0.0
  %1715 = vmatpush1.msra.mxu0 0.0
  %1716 = vmatprep.subr.mxu0 0.0
  %1717 = vmatpush1.msra.mxu0 0.0
  %1718 = vmatprep.subr.mxu0 0.0
  %1719 = vmatpush1.msra.mxu0 0.0
  %1720 = vmatprep.subr.mxu0 0.0
  %1721 = vmatpush1.msra.mxu0 0.0
  %1722 = vmatprep.subr.mxu0 0.0
  %1723 = vmatpush1.msra.mxu0 0.0
  %1724 = vmatprep.subr.mxu0 0.0
  %1725 = vmatpush1.msra.mxu0 0.0
  %1726 = vmatprep.subr.mxu0 0.0
  %1727 = vmatpush1.msra.mxu0 0.0
  %1728 = vmatprep.subr.mxu0 0.0
  %1729 = vmatpush1.msra.mxu0 0.0
  %1730 = vmatprep.mubr.f32.mxu0 0.0
  %1731 = vmatmul.mubr.f32.gmra.mrb[0].mxu0 %v1658
  %v1732 = vpop.f32.mrb[0].mxu0
  %v1733 = vadd.f32 0.0, %v1732
  %v1734 = vpop.f32.mrb[0].mxu0
  %1735 = vmatprep.mubr.f32.mxu0 0.0
  %1736 = vmatmul.mubr.f32.gmra.mrb[0].mxu0 %v1661
  %v1737 = vpop.f32.mrb[0].mxu0
  %v1738 = vadd.f32 0.0, %v1737
  %v1739 = vpop.f32.mrb[0].mxu0
  %1740 = vmatprep.mubr.f32.mxu0 0.0
  %1741 = vmatmul.mubr.f32.gmra.mrb[0].mxu0 %v1664
  %v1742 = vpop.f32.mrb[0].mxu0
  %v1743 = vadd.f32 0.0, %v1742
  %v1744 = vpop.f32.mrb[0].mxu0
  %1745 = vdwg.mxu0
  %v1746 = vadd.f32 %v1086, %v1733
  %v1747 = vadd.f32 %v1087, %v1738
  %v1748 = vadd.f32 %v1088, %v1743
  %v1749 = vlaneseq
  %v1750 = vshrl.u32 %v1749, 7
  %v1751 = vsub.s32 4, %v1750
  %v1752 = vrot.slane %v1090, %v1751
  %v1753 = vadd.f32 %v1746, %v1752
  %v1754 = vadd.f32 %v1747, %v1752
  %v1755 = vadd.f32 %v1748, %v1752
  %v1756 = vsel %vm54, %v1753, 0.0
  %1757 = vadd.xlane.f32.xlu0 %v1756
  %v1758 = vpop.xlane.xlu0 %1757
  %v1759 = vsel %vm54, %v1754, 0.0
  %1760 = vadd.xlane.f32.xlu0 %v1759
  %v1761 = vpop.xlane.xlu0 %1760
  %v1762 = vsel %vm54, %v1755, 0.0
  %1763 = vadd.xlane.f32.xlu0 %v1762
  %v1764 = vpop.xlane.xlu0 %1763
  %v1765 = vmul.f32 %v1758, %v64
  %v1766 = vmul.f32 %v1761, %v64
  %v1767 = vmul.f32 %v1764, %v64
  %v1768 = vsub.f32 %v1753, %v1765
  %v1769 = vsub.f32 %v1754, %v1766
  %v1770 = vsub.f32 %v1755, %v1767
  %v1771 = vmul.f32 %v1768, %v1768
  %v1772 = vmul.f32 %v1769, %v1769
  %v1773 = vmul.f32 %v1770, %v1770
  %v1774 = vsel %vm54, %v1771, 0.0
  %1775 = vadd.xlane.f32.xlu0 %v1774
  %v1776 = vpop.xlane.xlu0 %1775
  %v1777 = vsel %vm54, %v1772, 0.0
  %1778 = vadd.xlane.f32.xlu0 %v1777
  %v1779 = vpop.xlane.xlu0 %1778
  %v1780 = vsel %vm54, %v1773, 0.0
  %1781 = vadd.xlane.f32.xlu0 %v1780
  %v1782 = vpop.xlane.xlu0 %1781
  %v1783 = vmul.f32 %v1776, %v64
  %v1784 = vmul.f32 %v1779, %v64
  %v1785 = vmul.f32 %v1782, %v64
  %v1786 = vadd.f32 %v1783, 1e-05
  %v1787 = vadd.f32 %v1784, 1e-05
  %v1788 = vadd.f32 %v1785, 1e-05
  %v1789 = vrsqrt.pop %v1786
  %v1790 = vrsqrt.pop %v1787
  %v1791 = vrsqrt.pop %v1788
  %v1792 = vmul.f32 %v1768, %v1789
  %v1793 = vmul.f32 %v1769, %v1790
  %v1794 = vmul.f32 %v1770, %v1791
  %v1795 = vlaneseq
  %v1796 = vshrl.u32 %v1795, 7
  %v1797 = vsub.s32 2, %v1796
  %v1798 = vrot.slane %v1090, %v1797
  %v1799 = vmul.f32 %v1792, %v1798
  %v1800 = vmul.f32 %v1793, %v1798
  %v1801 = vmul.f32 %v1794, %v1798
  %v1802 = vlaneseq
  %v1803 = vshrl.u32 %v1802, 7
  %v1804 = vsub.s32 3, %v1803
  %v1805 = vrot.slane %v1090, %v1804
  %v1806 = vadd.f32 %v1799, %v1805
  %v1807 = vadd.f32 %v1800, %v1805
  %v1808 = vadd.f32 %v1801, %v1805
  %s1809 = scalar_lea.vmem %s3, 32
  %v1810 = vld [vmem:[%s1809] sm:$0xff]
  %v1811 = vld [vmem:[%s1809 + $0x8] sm:$0xff]
  %v1812 = vld [vmem:[%s1809 + $0x10] sm:$0xff]
  %v1813 = vld [vmem:[%s1809 + $0x18] sm:$0xff]
  %v1814 = vlaneseq
  %v1815 = vshrl.u32 %v1814, 7
  %v1816 = vsub.s32 5, %v1815
  %v1817 = vrot.slane %v1090, %v1816
  %v1819 = vsel %vm54, %v1806, 0
  %v1822 = vsel %vm54, %v1807, 0
  %v1825 = vsel %vm54, %v1808, 0
  %1827 = vmatprep.subr.mxu0 0.0
  %1828 = vmatpush1.msra.mxu0 %v1810
  %1829 = vmatprep.subr.mxu0 0.0
  %1830 = vmatpush1.msra.mxu0 %v1811
  %1831 = vmatprep.subr.mxu0 0.0
  %1832 = vmatpush1.msra.mxu0 %v1812
  %1833 = vmatprep.subr.mxu0 0.0
  %1834 = vmatpush1.msra.mxu0 %v1813
  %1835 = vmatprep.subr.mxu0 0.0
  %1836 = vmatpush1.msra.mxu0 0.0
  %1837 = vmatprep.subr.mxu0 0.0
  %1838 = vmatpush1.msra.mxu0 0.0
  %1839 = vmatprep.subr.mxu0 0.0
  %1840 = vmatpush1.msra.mxu0 0.0
  %1841 = vmatprep.subr.mxu0 0.0
  %1842 = vmatpush1.msra.mxu0 0.0
  %1843 = vmatprep.subr.mxu0 0.0
  %1844 = vmatpush1.msra.mxu0 0.0
  %1845 = vmatprep.subr.mxu0 0.0
  %1846 = vmatpush1.msra.mxu0 0.0
  %1847 = vmatprep.subr.mxu0 0.0
  %1848 = vmatpush1.msra.mxu0 0.0
  %1849 = vmatprep.subr.mxu0 0.0
  %1850 = vmatpush1.msra.mxu0 0.0
  %1851 = vmatprep.subr.mxu0 0.0
  %1852 = vmatpush1.msra.mxu0 0.0
  %1853 = vmatprep.subr.mxu0 0.0
  %1854 = vmatpush1.msra.mxu0 0.0
  %1855 = vmatprep.subr.mxu0 0.0
  %1856 = vmatpush1.msra.mxu0 0.0
  %1857 = vmatprep.subr.mxu0 0.0
  %1858 = vmatpush1.msra.mxu0 0.0
  %1859 = vmatprep.subr.mxu0 0.0
  %1860 = vmatpush1.msra.mxu0 0.0
  %1861 = vmatprep.subr.mxu0 0.0
  %1862 = vmatpush1.msra.mxu0 0.0
  %1863 = vmatprep.subr.mxu0 0.0
  %1864 = vmatpush1.msra.mxu0 0.0
  %1865 = vmatprep.subr.mxu0 0.0
  %1866 = vmatpush1.msra.mxu0 0.0
  %1867 = vmatprep.subr.mxu0 0.0
  %1868 = vmatpush1.msra.mxu0 0.0
  %1869 = vmatprep.subr.mxu0 0.0
  %1870 = vmatpush1.msra.mxu0 0.0
  %1871 = vmatprep.subr.mxu0 0.0
  %1872 = vmatpush1.msra.mxu0 0.0
  %1873 = vmatprep.subr.mxu0 0.0
  %1874 = vmatpush1.msra.mxu0 0.0
  %1875 = vmatprep.subr.mxu0 0.0
  %1876 = vmatpush1.msra.mxu0 0.0
  %1877 = vmatprep.subr.mxu0 0.0
  %1878 = vmatpush1.msra.mxu0 0.0
  %1879 = vmatprep.subr.mxu0 0.0
  %1880 = vmatpush1.msra.mxu0 0.0
  %1881 = vmatprep.subr.mxu0 0.0
  %1882 = vmatpush1.msra.mxu0 0.0
  %1883 = vmatprep.subr.mxu0 0.0
  %1884 = vmatpush1.msra.mxu0 0.0
  %1885 = vmatprep.subr.mxu0 0.0
  %1886 = vmatpush1.msra.mxu0 0.0
  %1887 = vmatprep.subr.mxu0 0.0
  %1888 = vmatpush1.msra.mxu0 0.0
  %1889 = vmatprep.subr.mxu0 0.0
  %1890 = vmatpush1.msra.mxu0 0.0
  %1891 = vmatprep.mubr.f32.mxu0 0.0
  %1892 = vmatmul.mubr.f32.gmra.mrb[0].mxu0 %v1819
  %v1893 = vpop.f32.mrb[0].mxu0
  %v1894 = vadd.f32 %v1817, %v1893
  %v1895 = vpop.f32.mrb[0].mxu0
  %1896 = vmatprep.mubr.f32.mxu0 0.0
  %1897 = vmatmul.mubr.f32.gmra.mrb[0].mxu0 %v1822
  %v1898 = vpop.f32.mrb[0].mxu0
  %v1899 = vadd.f32 %v1817, %v1898
  %v1900 = vpop.f32.mrb[0].mxu0
  %1901 = vmatprep.mubr.f32.mxu0 0.0
  %1902 = vmatmul.mubr.f32.gmra.mrb[0].mxu0 %v1825
  %v1903 = vpop.f32.mrb[0].mxu0
  %v1904 = vadd.f32 %v1817, %v1903
  %v1905 = vpop.f32.mrb[0].mxu0
  %1906 = vdwg.mxu0
  %v1907 = vmul.f32 %v1894, %v1894
  %v1908 = vmul.f32 %v1899, %v1899
  %v1909 = vmul.f32 %v1904, %v1904
  %v1910 = vmul.f32 %v1894, %v1907
  %v1911 = vmul.f32 %v1899, %v1908
  %v1912 = vmul.f32 %v1904, %v1909
  %v1913 = vmul.f32 %v1910, 0.044715
  %v1914 = vmul.f32 %v1911, 0.044715
  %v1915 = vmul.f32 %v1912, 0.044715
  %v1916 = vadd.f32 %v1894, %v1913
  %v1917 = vadd.f32 %v1899, %v1914
  %v1918 = vadd.f32 %v1904, %v1915
  %v1919 = vmul.f32 %v1916, 0.7978846
  %v1920 = vmul.f32 %v1917, 0.7978846
  %v1921 = vmul.f32 %v1918, 0.7978846
  %v1922 = vtanh.pop %v1919
  %v1923 = vtanh.pop %v1920
  %v1924 = vtanh.pop %v1921
  %v1925 = vadd.f32 %v1922, 1.0
  %v1926 = vadd.f32 %v1923, 1.0
  %v1927 = vadd.f32 %v1924, 1.0
  %v1928 = vmul.f32 %v1925, 0.5
  %v1929 = vmul.f32 %v1926, 0.5
  %v1930 = vmul.f32 %v1927, 0.5
  %v1931 = vmul.f32 %v1894, %v1928
  %v1932 = vmul.f32 %v1899, %v1929
  %v1933 = vmul.f32 %v1904, %v1930
  %s1934 = scalar_lea.vmem %s4, 64
  %v1935 = vld [vmem:[%s1934] sm:$0xff]
  %v1936 = vld [vmem:[%s1934 + $0x8] sm:$0xff]
  %v1937 = vld [vmem:[%s1934 + $0x10] sm:$0xff]
  %v1938 = vld [vmem:[%s1934 + $0x18] sm:$0xff]
  %v1939 = vld [vmem:[%s1934 + $0x20] sm:$0xff]
  %v1940 = vld [vmem:[%s1934 + $0x28] sm:$0xff]
  %v1941 = vld [vmem:[%s1934 + $0x30] sm:$0xff]
  %v1942 = vld [vmem:[%s1934 + $0x38] sm:$0xff]
  %v1944 = vsel %vm989, %v1931, 0
  %v1947 = vsel %vm989, %v1932, 0
  %v1950 = vsel %vm989, %v1933, 0
  %1952 = vmatprep.subr.mxu0 0.0
  %1953 = vmatpush1.msra.mxu0 %v1935
  %1954 = vmatprep.subr.mxu0 0.0
  %1955 = vmatpush1.msra.mxu0 %v1936
  %1956 = vmatprep.subr.mxu0 0.0
  %1957 = vmatpush1.msra.mxu0 %v1937
  %1958 = vmatprep.subr.mxu0 0.0
  %1959 = vmatpush1.msra.mxu0 %v1938
  %1960 = vmatprep.subr.mxu0 0.0
  %1961 = vmatpush1.msra.mxu0 %v1939
  %1962 = vmatprep.subr.mxu0 0.0
  %1963 = vmatpush1.msra.mxu0 %v1940
  %1964 = vmatprep.subr.mxu0 0.0
  %1965 = vmatpush1.msra.mxu0 %v1941
  %1966 = vmatprep.subr.mxu0 0.0
  %1967 = vmatpush1.msra.mxu0 %v1942
  %1968 = vmatprep.subr.mxu0 0.0
  %1969 = vmatpush1.msra.mxu0 0.0
  %1970 = vmatprep.subr.mxu0 0.0
  %1971 = vmatpush1.msra.mxu0 0.0
  %1972 = vmatprep.subr.mxu0 0.0
  %1973 = vmatpush1.msra.mxu0 0.0
  %1974 = vmatprep.subr.mxu0 0.0
  %1975 = vmatpush1.msra.mxu0 0.0
  %1976 = vmatprep.subr.mxu0 0.0
  %1977 = vmatpush1.msra.mxu0 0.0
  %1978 = vmatprep.subr.mxu0 0.0
  %1979 = vmatpush1.msra.mxu0 0.0
  %1980 = vmatprep.subr.mxu0 0.0
  %1981 = vmatpush1.msra.mxu0 0.0
  %1982 = vmatprep.subr.mxu0 0.0
  %1983 = vmatpush1.msra.mxu0 0.0
  %1984 = vmatprep.subr.mxu0 0.0
  %1985 = vmatpush1.msra.mxu0 0.0
  %1986 = vmatprep.subr.mxu0 0.0
  %1987 = vmatpush1.msra.mxu0 0.0
  %1988 = vmatprep.subr.mxu0 0.0
  %1989 = vmatpush1.msra.mxu0 0.0
  %1990 = vmatprep.subr.mxu0 0.0
  %1991 = vmatpush1.msra.mxu0 0.0
  %1992 = vmatprep.subr.mxu0 0.0
  %1993 = vmatpush1.msra.mxu0 0.0
  %1994 = vmatprep.subr.mxu0 0.0
  %1995 = vmatpush1.msra.mxu0 0.0
  %1996 = vmatprep.subr.mxu0 0.0
  %1997 = vmatpush1.msra.mxu0 0.0
  %1998 = vmatprep.subr.mxu0 0.0
  %1999 = vmatpush1.msra.mxu0 0.0
  %2000 = vmatprep.subr.mxu0 0.0
  %2001 = vmatpush1.msra.mxu0 0.0
  %2002 = vmatprep.subr.mxu0 0.0
  %2003 = vmatpush1.msra.mxu0 0.0
  %2004 = vmatprep.subr.mxu0 0.0
  %2005 = vmatpush1.msra.mxu0 0.0
  %2006 = vmatprep.subr.mxu0 0.0
  %2007 = vmatpush1.msra.mxu0 0.0
  %2008 = vmatprep.subr.mxu0 0.0
  %2009 = vmatpush1.msra.mxu0 0.0
  %2010 = vmatprep.subr.mxu0 0.0
  %2011 = vmatpush1.msra.mxu0 0.0
  %2012 = vmatprep.subr.mxu0 0.0
  %2013 = vmatpush1.msra.mxu0 0.0
  %2014 = vmatprep.subr.mxu0 0.0
  %2015 = vmatpush1.msra.mxu0 0.0
  %2016 = vmatprep.mubr.f32.mxu0 0.0
  %2017 = vmatmul.mubr.f32.gmra.mrb[0].mxu0 %v1944
  %v2018 = vpop.f32.mrb[0].mxu0
  %v2019 = vadd.f32 0.0, %v2018
  %v2020 = vpop.f32.mrb[0].mxu0
  %2021 = vmatprep.mubr.f32.mxu0 0.0
  %2022 = vmatmul.mubr.f32.gmra.mrb[0].mxu0 %v1947
  %v2023 = vpop.f32.mrb[0].mxu0
  %v2024 = vadd.f32 0.0, %v2023
  %v2025 = vpop.f32.mrb[0].mxu0
  %2026 = vmatprep.mubr.f32.mxu0 0.0
  %2027 = vmatmul.mubr.f32.gmra.mrb[0].mxu0 %v1950
  %v2028 = vpop.f32.mrb[0].mxu0
  %v2029 = vadd.f32 0.0, %v2028
  %v2030 = vpop.f32.mrb[0].mxu0
  %2031 = vdwg.mxu0
  %v2032 = vadd.f32 %v1753, %v2019
  %v2033 = vadd.f32 %v1754, %v2024
  %v2034 = vadd.f32 %v1755, %v2029
  %v2035 = vlaneseq
  %v2036 = vshrl.u32 %v2035, 7
  %v2037 = vsub.s32 6, %v2036
  %v2038 = vrot.slane %v1090, %v2037
  %v2039 = vadd.f32 %v2032, %v2038
  %v2040 = vadd.f32 %v2033, %v2038
  %v2041 = vadd.f32 %v2034, %v2038
  %v2042 = vld [vmem:[%s6] sm:$0xff]
  %v2043 = vld [vmem:[%s6 + $0x8] sm:$0xff]
  %v2044 = vld [vmem:[%s6 + $0x10] sm:$0xff]
  %v2045 = vld [vmem:[%s6 + $0x18] sm:$0xff]
  %v2046 = vld [vmem:[%s7] sm:$0x1]
  %v2048 = vlaneseq
  %v2049 = vshrl.u32 %v2048, 7
  %v2050 = vsub.s32 0, %v2049
  %v2051 = vrot.slane %v2046, %v2050
  %v2054 = vsel %vm54, %v2039, 0
  %v2057 = vsel %vm54, %v2040, 0
  %v2060 = vsel %vm54, %v2041, 0
  %2062 = vmatprep.subr.mxu0 0.0
  %2063 = vmatpush1.msra.mxu0 %v2042
  %2064 = vmatprep.subr.mxu0 0.0
  %2065 = vmatpush1.msra.mxu0 %v2043
  %2066 = vmatprep.subr.mxu0 0.0
  %2067 = vmatpush1.msra.mxu0 %v2044
  %2068 = vmatprep.subr.mxu0 0.0
  %2069 = vmatpush1.msra.mxu0 %v2045
  %2070 = vmatprep.subr.mxu0 0.0
  %2071 = vmatpush1.msra.mxu0 0.0
  %2072 = vmatprep.subr.mxu0 0.0
  %2073 = vmatpush1.msra.mxu0 0.0
  %2074 = vmatprep.subr.mxu0 0.0
  %2075 = vmatpush1.msra.mxu0 0.0
  %2076 = vmatprep.subr.mxu0 0.0
  %2077 = vmatpush1.msra.mxu0 0.0
  %2078 = vmatprep.subr.mxu0 0.0
  %2079 = vmatpush1.msra.mxu0 0.0
  %2080 = vmatprep.subr.mxu0 0.0
  %2081 = vmatpush1.msra.mxu0 0.0
  %2082 = vmatprep.subr.mxu0 0.0
  %2083 = vmatpush1.msra.mxu0 0.0
  %2084 = vmatprep.subr.mxu0 0.0
  %2085 = vmatpush1.msra.mxu0 0.0
  %2086 = vmatprep.subr.mxu0 0.0
  %2087 = vmatpush1.msra.mxu0 0.0
  %2088 = vmatprep.subr.mxu0 0.0
  %2089 = vmatpush1.msra.mxu0 0.0
  %2090 = vmatprep.subr.mxu0 0.0
  %2091 = vmatpush1.msra.mxu0 0.0
  %2092 = vmatprep.subr.mxu0 0.0
  %2093 = vmatpush1.msra.mxu0 0.0
  %2094 = vmatprep.subr.mxu0 0.0
  %2095 = vmatpush1.msra.mxu0 0.0
  %2096 = vmatprep.subr.mxu0 0.0
  %2097 = vmatpush1.msra.mxu0 0.0
  %2098 = vmatprep.subr.mxu0 0.0
  %2099 = vmatpush1.msra.mxu0 0.0
  %2100 = vmatprep.subr.mxu0 0.0
  %2101 = vmatpush1.msra.mxu0 0.0
  %2102 = vmatprep.subr.mxu0 0.0
  %2103 = vmatpush1.msra.mxu0 0.0
  %2104 = vmatprep.subr.mxu0 0.0
  %2105 = vmatpush1.msra.mxu0 0.0
  %2106 = vmatprep.subr.mxu0 0.0
  %2107 = vmatpush1.msra.mxu0 0.0
  %2108 = vmatprep.subr.mxu0 0.0
  %2109 = vmatpush1.msra.mxu0 0.0
  %2110 = vmatprep.subr.mxu0 0.0
  %2111 = vmatpush1.msra.mxu0 0.0
  %2112 = vmatprep.subr.mxu0 0.0
  %2113 = vmatpush1.msra.mxu0 0.0
  %2114 = vmatprep.subr.mxu0 0.0
  %2115 = vmatpush1.msra.mxu0 0.0
  %2116 = vmatprep.subr.mxu0 0.0
  %2117 = vmatpush1.msra.mxu0 0.0
  %2118 = vmatprep.subr.mxu0 0.0
  %2119 = vmatpush1.msra.mxu0 0.0
  %2120 = vmatprep.subr.mxu0 0.0
  %2121 = vmatpush1.msra.mxu0 0.0
  %2122 = vmatprep.subr.mxu0 0.0
  %2123 = vmatpush1.msra.mxu0 0.0
  %2124 = vmatprep.subr.mxu0 0.0
  %2125 = vmatpush1.msra.mxu0 0.0
  %2126 = vmatprep.mubr.f32.mxu0 0.0
  %2127 = vmatmul.mubr.f32.gmra.mrb[0].mxu0 %v2054
  %v2128 = vpop.f32.mrb[0].mxu0
  %v2129 = vadd.f32 %v2051, %v2128
  %v2130 = vpop.f32.mrb[0].mxu0
  %2131 = vmatprep.mubr.f32.mxu0 0.0
  %2132 = vmatmul.mubr.f32.gmra.mrb[0].mxu0 %v2057
  %v2133 = vpop.f32.mrb[0].mxu0
  %v2134 = vadd.f32 %v2051, %v2133
  %v2135 = vpop.f32.mrb[0].mxu0
  %2136 = vmatprep.mubr.f32.mxu0 0.0
  %2137 = vmatmul.mubr.f32.gmra.mrb[0].mxu0 %v2060
  %v2138 = vpop.f32.mrb[0].mxu0
  %v2139 = vadd.f32 %v2051, %v2138
  %v2140 = vpop.f32.mrb[0].mxu0
  %2141 = vdwg.mxu0
  %2142 = vst [vmem:[%s10] sm:$0xff] %v2129
  %2143 = vst [vmem:[%s10 + $0x8] sm:$0xff] %v2134
  %2144 = vst [vmem:[%s10 + $0x10] sm:$0xff] %v2139
  // Predicated region
  $region42: #{glove_mixed_gussan_forward.3} parent=0 // pred_check
    _
  $region43: #{glove_mixed_gussan_forward.3} parent=0 // pred_check_branch
    %2146 = sbr.rel (0) target = $region45
  $region44: #{glove_mixed_gussan_forward.3} parent=0 // pred_region
    _
  $region45: #{glove_mixed_gussan_forward.3} parent=0 // pred_fallthru
    _
  // Predicated region
  $region46: #{glove_mixed_gussan_forward.3} parent=0 // pred_check
    _
  $region47: #{glove_mixed_gussan_forward.3} parent=0 // pred_check_branch
    %2148 = sbr.rel (0) target = $region49
  $region48: #{glove_mixed_gussan_forward.3} parent=0 // pred_region
    _
  $region49: #{glove_mixed_gussan_forward.3} parent=0 // pred_fallthru
    _

</llo_original>
